<compile_context>
chip_gen: v7x
topology: tpu7x:2x2x1
jax: 0.10.0
libtpu: 0.0.40
codegen_flags: <defaults>
</compile_context>

<pallas_src>
import math

import jax
import jax.numpy as jnp
from jax import lax
from jax.experimental import pallas as pl
from jax.experimental.pallas import tpu as pltpu


# ---------------------------------------------------------------------------
# helpers
# ---------------------------------------------------------------------------
def _pick_tile(n, prefs):
    for t in prefs:
        if t <= n and n % t == 0:
            return t
    return n  # small (or ragged) n -> single tile


def _vmem_limit_bytes():
    # ~75% of physical VMEM, capped at 100 MiB: ~96 MiB on 128-MiB parts (v5e/v6e),
    # 48 MiB on 64-MiB parts (v7x).  Conservative 64-MiB assumption if the query fails.
    try:
        cap = int(pltpu.get_tpu_info().vmem_capacity_bytes)
    except Exception:
        cap = 64 * 1024 * 1024
    return max(32 * 1024 * 1024, min(int(cap * 0.75), 100 * 1024 * 1024))


# ---------------------------------------------------------------------------
# Kernel 1: GroupNorm statistics -> fused per-channel affine (s, t)
#   grid = (B, HW//tm), axis 1 is a sequential reduction over HW tiles.
# ---------------------------------------------------------------------------
def _gn_stats_kernel(eps, hw_total, group):
    def kernel(x_ref, gmap_ref, gmapT_ref, gamma_ref, beta_ref,
               s_ref, t_ref, sum_ref, sq_ref):
        @pl.when(pl.program_id(1) == 0)
        def _():
            sum_ref[...] = jnp.zeros(sum_ref.shape, sum_ref.dtype)
            sq_ref[...] = jnp.zeros(sq_ref.shape, sq_ref.dtype)

        x = x_ref[0]                                              # (C, tm) f32, channel-major
        sum_ref[...] += jnp.sum(x, axis=1, keepdims=True)         # (C, 1)
        sq_ref[...] += jnp.sum(x * x, axis=1, keepdims=True)      # (C, 1)

        @pl.when(pl.program_id(1) == pl.num_programs(1) - 1)
        def _():
            C = x.shape[0]
            n = float(hw_total * (C // group))
            # per-group sums via tiny one-hot matvecs (kept in f32)
            g_sum = jnp.dot(gmapT_ref[...], sum_ref[...],
                            preferred_element_type=jnp.float32)   # (G, 1)
            g_sq = jnp.dot(gmapT_ref[...], sq_ref[...],
                           preferred_element_type=jnp.float32)    # (G, 1)
            g_mean = g_sum / n
            g_var = g_sq / n - g_mean * g_mean                    # biased var (PyTorch GN)
            g_inv = lax.rsqrt(g_var + eps)
            mean_c = jnp.dot(gmap_ref[...], g_mean,
                             preferred_element_type=jnp.float32)  # (C, 1)
            inv_c = jnp.dot(gmap_ref[...], g_inv,
                            preferred_element_type=jnp.float32)   # (C, 1)
            s = gamma_ref[...] * inv_c                            # (C, 1)
            t = beta_ref[...] - mean_c * s                        # (C, 1)
            s_ref[0] = s
            t_ref[0] = t

    return kernel


# ---------------------------------------------------------------------------
# Kernel 2: apply GN affine + qkv projection (three direct matmuls, K emitted transposed)
#   grid = (B, HW//tm), both axes parallel.
# ---------------------------------------------------------------------------
def _gn_apply_qkv_kernel():
    def kernel(x_ref, s_ref, t_ref, wqT_ref, wk_ref, wvT_ref, q_ref, kt_ref, v_ref):
        x_cm = x_ref[0]                                           # (C, tm) f32
        xn_cm_f32 = x_cm * s_ref[0] + t_ref[0]                    # fused affine, f32
        xn_cm = xn_cm_f32.astype(jnp.bfloat16)                    # (C, tm) bf16
        # one f32 XLU transpose per tile (kernel is MXU-bound, XLU has slack)
        xn = jnp.transpose(xn_cm_f32).astype(jnp.bfloat16)        # (tm, C) bf16
        q_ref[0] = jnp.dot(xn, wqT_ref[...],
                           preferred_element_type=jnp.float32).astype(jnp.bfloat16)
        v_ref[0] = jnp.dot(xn, wvT_ref[...],
                           preferred_element_type=jnp.float32).astype(jnp.bfloat16)
        # K produced directly transposed: Wk (Cout,Cin) @ xn_cm (Cin,tm) -> (Cout, tm)
        kt_ref[0] = jnp.dot(wk_ref[...], xn_cm,
                            preferred_element_type=jnp.float32).astype(jnp.bfloat16)

    return kernel


# ---------------------------------------------------------------------------
# Kernel 3a: flash attention (online softmax over KV blocks) + proj + bias + residual
#   grid = (B, nq, nk), dims = ("parallel", "parallel", "arbitrary")
# ---------------------------------------------------------------------------
def _attn_proj_flash_kernel(num_heads):
    def kernel(q_ref, kt_ref, v_ref, x_ref, wproj_ref, bproj_ref, o_ref,
               acc_ref, m_ref, l_ref):
        ki = pl.program_id(2)
        nk = pl.num_programs(2)

        @pl.when(ki == 0)
        def _():
            m_ref[...] = jnp.full(m_ref.shape, -jnp.inf, m_ref.dtype)
            l_ref[...] = jnp.zeros(l_ref.shape, l_ref.dtype)
            acc_ref[...] = jnp.zeros(acc_ref.shape, acc_ref.dtype)

        q = q_ref[0]                      # (tq, C) bf16, cd**-0.25 folded into Wq/Wk
        kt = kt_ref[0]                    # (C, tk) bf16 (pre-transposed K)
        v = v_ref[0]                      # (tk, C) bf16
        C = q.shape[1]
        cd = C // num_heads

        # static unroll over heads (num_heads is small in diffusion U-Nets; head slices are
        # lane-aligned when cd is a multiple of 128 -- see wrapper/demo config)
        for h in range(num_heads):
            lo, hi = h * cd, (h + 1) * cd
            s = jnp.dot(q[:, lo:hi], kt[lo:hi, :],
                        preferred_element_type=jnp.float32)       # (tq, tk), canonical matmul
            m_prev = m_ref[h]                                     # (tq, 1)
            m_new = jnp.maximum(m_prev, jnp.max(s, axis=-1, keepdims=True))
            alpha = jnp.exp(m_prev - m_new)
            p = jnp.exp(s - m_new)                                # f32 exp (safe on all gens)
            l_ref[h] = alpha * l_ref[h] + jnp.sum(p, axis=-1, keepdims=True)
            pv = jnp.dot(p.astype(jnp.bfloat16), v[:, lo:hi],
                         preferred_element_type=jnp.float32)      # (tq, cd)
            acc_ref[:, lo:hi] = alpha * acc_ref[:, lo:hi] + pv
            m_ref[h] = m_new

        @pl.when(ki == nk - 1)
        def _():
            for h in range(num_heads):
                lo, hi = h * cd, (h + 1) * cd
                acc_ref[:, lo:hi] = acc_ref[:, lo:hi] * pl.reciprocal(l_ref[h], approx=True)
            # channel-major epilogue: out_cm = Wproj @ h^T + bias + residual
            h_cm = jnp.transpose(acc_ref[...]).astype(jnp.bfloat16)          # (C, tq)
            out_cm = jnp.dot(wproj_ref[...], h_cm,
                             preferred_element_type=jnp.float32)             # (C, tq)
            out_cm = out_cm + bproj_ref[...] + x_ref[0]
            o_ref[0] = out_cm.astype(o_ref.dtype)

    return kernel


# ---------------------------------------------------------------------------
# Kernel 3b: single-pass attention (full KV resident, no online-softmax machinery)
#   grid = (B, nq), both axes parallel.
# ---------------------------------------------------------------------------
def _attn_proj_single_kernel(num_heads):
    def kernel(q_ref, kt_ref, v_ref, x_ref, wproj_ref, bproj_ref, o_ref, acc_ref):
        q = q_ref[0]                      # (tq, C) bf16
        kt = kt_ref[0]                    # (C, HW) bf16
        v = v_ref[0]                      # (HW, C) bf16
        C = q.shape[1]
        cd = C // num_heads

        for h in range(num_heads):
            lo, hi = h * cd, (h + 1) * cd
            s = jnp.dot(q[:, lo:hi], kt[lo:hi, :],
                        preferred_element_type=jnp.float32)       # (tq, HW)
            m = jnp.max(s, axis=-1, keepdims=True)
            p = jnp.exp(s - m)
            l = jnp.sum(p, axis=-1, keepdims=True)
            oh = jnp.dot(p.astype(jnp.bfloat16), v[:, lo:hi],
                         preferred_element_type=jnp.float32)      # (tq, cd)
            acc_ref[:, lo:hi] = oh * pl.reciprocal(l, approx=True)

        h_cm = jnp.transpose(acc_ref[...]).astype(jnp.bfloat16)              # (C, tq)
        out_cm = jnp.dot(wproj_ref[...], h_cm, preferred_element_type=jnp.float32)
        out_cm = out_cm + bproj_ref[...] + x_ref[0]
        o_ref[0] = out_cm.astype(o_ref.dtype)

    return kernel


# ---------------------------------------------------------------------------
# Wrapper
# ---------------------------------------------------------------------------
def attention_block_pallas(x_nchw, gamma, beta, w_qkv, w_proj, b_proj,
                           num_heads=1, group=32, eps=1e-5,
                           tm=None, tq=None, tk=None):
    """x_nchw: (B, C, H, W) float32.  Returns (B, C, H, W) float32."""
    B, C, H, W = x_nchw.shape
    HW = H * W
    assert C % num_heads == 0 and C % group == 0
    cd = C // num_heads
    f32, bf16 = jnp.float32, jnp.bfloat16

    vmem_limit = _vmem_limit_bytes()

    tm = tm if tm is not None else _pick_tile(HW, (512, 256, 128))
    tq = tq if tq is not None else _pick_tile(HW, (256, 128))
    assert HW % tm == 0 and HW % tq == 0, "tiles must divide HW"

    # flash vs full-KV single-pass decision (VMEM budget estimate, double-buffered)
    def _attn_vmem(tq_, tk_):
        blocks = (tq_ * C * 2 + C * tk_ * 2 + tk_ * C * 2      # q, k^T, v (bf16)
                  + C * tq_ * 4 + C * C * 2 + C * 128 * 4      # residual, Wproj, bias (padded)
                  + C * tq_ * 4)                               # output
        scratch = tq_ * C * 4 + 2 * num_heads * tq_ * 128 * 4
        return 2 * blocks + scratch

    if tk is None:
        tk = HW if _attn_vmem(tq, HW) < 0.7 * vmem_limit \
            else _pick_tile(HW, (1024, 512, 256, 128))
    assert HW % tk == 0, "tk must divide HW"
    nm, nq, nk = HW // tm, HW // tq, HW // tk

    # channel-major token view (pure reshape; no HBM transpose)
    x_cm = x_nchw.reshape(B, C, HW).astype(f32)

    gamma_col = gamma.reshape(C, 1).astype(f32)
    beta_col = beta.reshape(C, 1).astype(f32)
    bproj_col = b_proj.reshape(C, 1).astype(f32)

    # one-hot group maps (both orientations precomputed -> no in-kernel transpose of them)
    ch_ids = jnp.arange(C) // (C // group)
    gmap = (ch_ids[:, None] == jnp.arange(group)[None, :]).astype(f32)    # (C, G)
    gmapT = gmap.T                                                        # (G, C)

    # Split/reorder the qkv conv weight (3C, C) into head-major Wq/Wk/Wv and fold the
    # cd**-0.25 softmax scale into Q and K.
    rows = jnp.arange(C)
    h_idx, c_idx = rows // cd, rows % cd
    q_rows = h_idx * 3 * cd + c_idx
    scale = 1.0 / math.sqrt(math.sqrt(cd))
    wq = w_qkv[q_rows] * scale                 # (Cout, Cin)
    wk = w_qkv[q_rows + cd] * scale            # (Cout, Cin)
    wv = w_qkv[q_rows + 2 * cd]                # (Cout, Cin)
    wqT = wq.T.astype(bf16)                    # (Cin, Cout):  q  = xn @ WqT
    wkb = wk.astype(bf16)                      # (Cout, Cin):  kT = Wk @ xn_cm
    wvT = wv.T.astype(bf16)                    # (Cin, Cout):  v  = xn @ WvT
    wprojb = w_proj.astype(bf16)               # (Cout, Cin):  out_cm = Wproj @ h^T

    def cparams(sem):
        return pltpu.CompilerParams(dimension_semantics=sem,
                                    vmem_limit_bytes=vmem_limit)

    # ---- pass 1: GroupNorm statistics -> (s, t) ----
    s_col, t_col = pl.pallas_call(
        _gn_stats_kernel(eps, HW, group),
        out_shape=(jax.ShapeDtypeStruct((B, C, 1), f32),
                   jax.ShapeDtypeStruct((B, C, 1), f32)),
        grid_spec=pltpu.PrefetchScalarGridSpec(
            num_scalar_prefetch=0, grid=(B, nm),
            in_specs=[
                pl.BlockSpec((1, C, tm), lambda b, i: (b, 0, i)),     # x (channel-major)
                pl.BlockSpec((C, group), lambda b, i: (0, 0)),        # gmap
                pl.BlockSpec((group, C), lambda b, i: (0, 0)),        # gmap^T
                pl.BlockSpec((C, 1), lambda b, i: (0, 0)),            # gamma
                pl.BlockSpec((C, 1), lambda b, i: (0, 0)),            # beta
            ],
            out_specs=(pl.BlockSpec((1, C, 1), lambda b, i: (b, 0, 0)),
                       pl.BlockSpec((1, C, 1), lambda b, i: (b, 0, 0))),
            scratch_shapes=[pltpu.VMEM((C, 1), f32),                  # running sum
                            pltpu.VMEM((C, 1), f32)]),                # running sumsq
        compiler_params=cparams(("parallel", "arbitrary")),
    )(x_cm, gmap, gmapT, gamma_col, beta_col)

    # ---- pass 2: apply GN affine + qkv projection ----
    q, kt, v = pl.pallas_call(
        _gn_apply_qkv_kernel(),
        out_shape=(jax.ShapeDtypeStruct((B, HW, C), bf16),            # Q (row-major)
                   jax.ShapeDtypeStruct((B, C, HW), bf16),            # K^T (channel-major)
                   jax.ShapeDtypeStruct((B, HW, C), bf16)),           # V (row-major)
        grid_spec=pltpu.PrefetchScalarGridSpec(
            num_scalar_prefetch=0, grid=(B, nm),
            in_specs=[
                pl.BlockSpec((1, C, tm), lambda b, i: (b, 0, i)),
                pl.BlockSpec((1, C, 1), lambda b, i: (b, 0, 0)),
                pl.BlockSpec((1, C, 1), lambda b, i: (b, 0, 0)),
                pl.BlockSpec((C, C), lambda b, i: (0, 0)),            # WqT
                pl.BlockSpec((C, C), lambda b, i: (0, 0)),            # Wk
                pl.BlockSpec((C, C), lambda b, i: (0, 0)),            # WvT
            ],
            out_specs=(pl.BlockSpec((1, tm, C), lambda b, i: (b, i, 0)),
                       pl.BlockSpec((1, C, tm), lambda b, i: (b, 0, i)),
                       pl.BlockSpec((1, tm, C), lambda b, i: (b, i, 0)))),
        compiler_params=cparams(("parallel", "parallel")),
    )(x_cm, s_col, t_col, wqT, wkb, wvT)

    # ---- pass 3: attention + proj + bias + residual (channel-major output) ----
    if nk == 1:
        out_cm = pl.pallas_call(
            _attn_proj_single_kernel(num_heads),
            out_shape=jax.ShapeDtypeStruct((B, C, HW), f32),
            grid_spec=pltpu.PrefetchScalarGridSpec(
                num_scalar_prefetch=0, grid=(B, nq),
                in_specs=[
                    pl.BlockSpec((1, tq, C), lambda b, qi: (b, qi, 0)),   # Q block
                    pl.BlockSpec((1, C, HW), lambda b, qi: (b, 0, 0)),    # full K^T
                    pl.BlockSpec((1, HW, C), lambda b, qi: (b, 0, 0)),    # full V
                    pl.BlockSpec((1, C, tq), lambda b, qi: (b, 0, qi)),   # residual x
                    pl.BlockSpec((C, C), lambda b, qi: (0, 0)),           # Wproj
                    pl.BlockSpec((C, 1), lambda b, qi: (0, 0)),           # bias
                ],
                out_specs=pl.BlockSpec((1, C, tq), lambda b, qi: (b, 0, qi)),
                scratch_shapes=[pltpu.VMEM((tq, C), f32)]),
            compiler_params=cparams(("parallel", "parallel")),
        )(q, kt, v, x_cm, wprojb, bproj_col)
    else:
        out_cm = pl.pallas_call(
            _attn_proj_flash_kernel(num_heads),
            out_shape=jax.ShapeDtypeStruct((B, C, HW), f32),
            grid_spec=pltpu.PrefetchScalarGridSpec(
                num_scalar_prefetch=0, grid=(B, nq, nk),
                in_specs=[
                    pl.BlockSpec((1, tq, C), lambda b, qi, ki: (b, qi, 0)),
                    pl.BlockSpec((1, C, tk), lambda b, qi, ki: (b, 0, ki)),
                    pl.BlockSpec((1, tk, C), lambda b, qi, ki: (b, ki, 0)),
                    pl.BlockSpec((1, C, tq), lambda b, qi, ki: (b, 0, qi)),
                    pl.BlockSpec((C, C), lambda b, qi, ki: (0, 0)),
                    pl.BlockSpec((C, 1), lambda b, qi, ki: (0, 0)),
                ],
                out_specs=pl.BlockSpec((1, C, tq), lambda b, qi, ki: (b, 0, qi)),
                scratch_shapes=[pltpu.VMEM((tq, C), f32),                 # acc (heads at offsets)
                                pltpu.VMEM((num_heads, tq, 1), f32),      # running max
                                pltpu.VMEM((num_heads, tq, 1), f32)]),    # running denom
            compiler_params=cparams(("parallel", "parallel", "arbitrary")),
        )(q, kt, v, x_cm, wprojb, bproj_col)

    return out_cm.reshape(B, C, H, W)


# ---------------------------------------------------------------------------
# Pure-JAX reference (mirrors the PyTorch forward, NCHW, f32)
# ---------------------------------------------------------------------------
def attention_block_reference(x, gamma, beta, w_qkv, w_proj, b_proj,
                              num_heads=1, group=32, eps=1e-5):
    B, C, H, W = x.shape
    xg = x.reshape(B, group, C // group, H, W)
    mean = xg.mean(axis=(2, 3, 4), keepdims=True)
    var = xg.var(axis=(2, 3, 4), keepdims=True)
    xn = (xg - mean) / jnp.sqrt(var + eps)
    xn = xn.reshape(B, C, H, W) * gamma[None, :, None, None] + beta[None, :, None, None]

    qkv = jnp.einsum('oc,bchw->bohw', w_qkv, xn, precision='highest')
    qkv = qkv.reshape(B * num_heads, -1, H * W)
    cd = C // num_heads
    q, k, v = qkv[:, :cd], qkv[:, cd:2 * cd], qkv[:, 2 * cd:]
    scale = 1.0 / math.sqrt(math.sqrt(cd))
    attn = jnp.einsum('bct,bcs->bts', q * scale, k * scale, precision='highest')
    attn = jax.nn.softmax(attn, axis=-1)
    h = jnp.einsum('bts,bcs->bct', attn, v, precision='highest')
    h = h.reshape(B, C, H, W)
    h = jnp.einsum('oc,bchw->bohw', w_proj, h, precision='highest') \
        + b_proj[None, :, None, None]
    return h + x


if __name__ == "__main__":
    # Small config with lane-aligned head dim (cd = 128): B=2, C=256, H=W=16, 2 heads.
    B, C, H, W = 2, 256, 16, 16
    num_heads, group = 2, 32

    key = jax.random.PRNGKey(0)
    k_x, k_qkv, k_proj, k_bias, k_g, k_b = jax.random.split(key, 6)

    x = jax.random.normal(k_x, (B, C, H, W), dtype=jnp.float32)
    gamma = 1.0 + 0.1 * jax.random.normal(k_g, (C,), dtype=jnp.float32)
    beta = 0.1 * jax.random.normal(k_b, (C,), dtype=jnp.float32)
    # Conv2d(C, 3C, 1, bias=False) weight (3C, C, 1, 1) -> (3C, C)
    w_qkv = 0.05 * jax.random.normal(k_qkv, (3 * C, C), dtype=jnp.float32)
    # Conv2d(C, C, 1) weight (C, C, 1, 1) -> (C, C), bias (C,)
    w_proj = 0.05 * jax.random.normal(k_proj, (C, C), dtype=jnp.float32)
    b_proj = 0.02 * jax.random.normal(k_bias, (C,), dtype=jnp.float32)

    ref = attention_block_reference(x, gamma, beta, w_qkv, w_proj, b_proj,
                                    num_heads=num_heads, group=group)

    # 1) forced flash (tiled-KV, online-softmax) path
    out_flash = attention_block_pallas(x, gamma, beta, w_qkv, w_proj, b_proj,
                                       num_heads=num_heads, group=group,
                                       tm=128, tq=128, tk=128)
    out_flash = jax.block_until_ready(out_flash)
    err1 = float(jnp.max(jnp.abs(out_flash - ref)))
    assert out_flash.shape == (B, C, H, W)
    assert jnp.allclose(out_flash, ref, atol=3e-2, rtol=3e-2), f"flash max abs err {err1}"

    # 2) auto config (single-pass full-KV softmax when it fits in VMEM)
    out_auto = attention_block_pallas(x, gamma, beta, w_qkv, w_proj, b_proj,
                                      num_heads=num_heads, group=group)
    out_auto = jax.block_until_ready(out_auto)
    err2 = float(jnp.max(jnp.abs(out_auto - ref)))
    assert jnp.allclose(out_auto, ref, atol=3e-2, rtol=3e-2), f"single-pass max abs err {err2}"

    print("KERNEL_OK")
</pallas_src>

<mosaic_0001>
module attributes {stable_mosaic.version = 11 : i64} {
  func.func @kernel(%arg0: i32, %arg1: i32, %arg2: memref<1x256x128xf32, #tpu.memory_space<vmem>>, %arg3: memref<256x32xf32, #tpu.memory_space<vmem>>, %arg4: memref<32x256xf32, #tpu.memory_space<vmem>>, %arg5: memref<256x1xf32, #tpu.memory_space<vmem>>, %arg6: memref<256x1xf32, #tpu.memory_space<vmem>>, %arg7: memref<1x256x1xf32, #tpu.memory_space<vmem>>, %arg8: memref<1x256x1xf32, #tpu.memory_space<vmem>>, %arg9: memref<256x1xf32, #tpu.memory_space<vmem>>, %arg10: memref<256x1xf32, #tpu.memory_space<vmem>>) attributes {dimension_semantics = [#tpu.dimension_semantics<parallel>, #tpu.dimension_semantics<arbitrary>], iteration_bounds = array<i64: 2, 2>, scalar_prefetch = 0 : i64, scratch_operands = 2 : i64, tpu.core_type = #tpu.core_type<tc>, window_params = [{transform_indices = @transform_0, window_bounds = array<i64: 1, 256, 128>}, {pipeline_mode = #tpu.pipeline_mode<synchronous>, transform_indices = @transform_1, window_bounds = array<i64: 256, 32>}, {pipeline_mode = #tpu.pipeline_mode<synchronous>, transform_indices = @transform_2, window_bounds = array<i64: 32, 256>}, {pipeline_mode = #tpu.pipeline_mode<synchronous>, transform_indices = @transform_3, window_bounds = array<i64: 256, 1>}, {pipeline_mode = #tpu.pipeline_mode<synchronous>, transform_indices = @transform_4, window_bounds = array<i64: 256, 1>}, {transform_indices = @transform_5, window_bounds = array<i64: 1, 256, 1>}, {transform_indices = @transform_6, window_bounds = array<i64: 1, 256, 1>}]} {
    %c0_i32 = arith.constant 0 : i32
    %0 = arith.cmpi eq, %arg1, %c0_i32 : i32
    %1 = arith.extui %0 : i1 to i32
    %c0_i32_0 = arith.constant 0 : i32
    %2 = arith.cmpi ne, %1, %c0_i32_0 : i32
    scf.if %2 {
      %cst_13 = arith.constant 0.000000e+00 : f32
      %19 = vector.broadcast %cst_13 : f32 to vector<256x1xf32>
      %c0_14 = arith.constant 0 : index
      %c0_15 = arith.constant 0 : index
      %20 = vector.load %arg9[%c0_14, %c0_15] : memref<256x1xf32, #tpu.memory_space<vmem>>, vector<256x1xf32>
      tpu.vector_store %arg9[%c0_14, %c0_15], %19 {strides = array<i32>} : memref<256x1xf32, #tpu.memory_space<vmem>>, vector<256x1xf32>,
      %cst_16 = arith.constant 0.000000e+00 : f32
      %21 = vector.broadcast %cst_16 : f32 to vector<256x1xf32>
      %c0_17 = arith.constant 0 : index
      %c0_18 = arith.constant 0 : index
      %22 = vector.load %arg10[%c0_17, %c0_18] : memref<256x1xf32, #tpu.memory_space<vmem>>, vector<256x1xf32>
      tpu.vector_store %arg10[%c0_17, %c0_18], %21 {strides = array<i32>} : memref<256x1xf32, #tpu.memory_space<vmem>>, vector<256x1xf32>,
    } else {
    }
    %c0 = arith.constant 0 : index
    %c0_1 = arith.constant 0 : index
    %c0_2 = arith.constant 0 : index
    %3 = vector.load %arg2[%c0, %c0_1, %c0_2] : memref<1x256x128xf32, #tpu.memory_space<vmem>>, vector<1x256x128xf32>
    %4 = vector.shape_cast %3 : vector<1x256x128xf32> to vector<256x128xf32>
    %c0_3 = arith.constant 0 : index
    %c0_4 = arith.constant 0 : index
    %5 = vector.load %arg9[%c0_3, %c0_4] : memref<256x1xf32, #tpu.memory_space<vmem>>, vector<256x1xf32>
    %cst = arith.constant dense<0.000000e+00> : vector<256xf32>
    %6 = vector.multi_reduction <add>, %4, %cst [1] : vector<256x128xf32> to vector<256xf32>
    %7 = vector.shape_cast %6 : vector<256xf32> to vector<256x1xf32>
    %8 = arith.addf %5, %7 : vector<256x1xf32>
    %c0_5 = arith.constant 0 : index
    %c0_6 = arith.constant 0 : index
    %9 = vector.load %arg9[%c0_5, %c0_6] : memref<256x1xf32, #tpu.memory_space<vmem>>, vector<256x1xf32>
    tpu.vector_store %arg9[%c0_5, %c0_6], %8 {strides = array<i32>} : memref<256x1xf32, #tpu.memory_space<vmem>>, vector<256x1xf32>,
    %c0_7 = arith.constant 0 : index
    %c0_8 = arith.constant 0 : index
    %10 = vector.load %arg10[%c0_7, %c0_8] : memref<256x1xf32, #tpu.memory_space<vmem>>, vector<256x1xf32>
    %11 = arith.mulf %4, %4 : vector<256x128xf32>
    %cst_9 = arith.constant dense<0.000000e+00> : vector<256xf32>
    %12 = vector.multi_reduction <add>, %11, %cst_9 [1] : vector<256x128xf32> to vector<256xf32>
    %13 = vector.shape_cast %12 : vector<256xf32> to vector<256x1xf32>
    %14 = arith.addf %10, %13 : vector<256x1xf32>
    %c0_10 = arith.constant 0 : index
    %c0_11 = arith.constant 0 : index
    %15 = vector.load %arg10[%c0_10, %c0_11] : memref<256x1xf32, #tpu.memory_space<vmem>>, vector<256x1xf32>
    tpu.vector_store %arg10[%c0_10, %c0_11], %14 {strides = array<i32>} : memref<256x1xf32, #tpu.memory_space<vmem>>, vector<256x1xf32>,
    %c1_i32 = arith.constant 1 : i32
    %16 = arith.cmpi eq, %arg1, %c1_i32 : i32
    %17 = arith.extui %16 : i1 to i32
    %c0_i32_12 = arith.constant 0 : i32
    %18 = arith.cmpi ne, %17, %c0_i32_12 : i32
    scf.if %18 {
      %c0_13 = arith.constant 0 : index
      %c0_14 = arith.constant 0 : index
      %19 = vector.load %arg4[%c0_13, %c0_14] : memref<32x256xf32, #tpu.memory_space<vmem>>, vector<32x256xf32>
      %c0_15 = arith.constant 0 : index
      %c0_16 = arith.constant 0 : index
      %20 = vector.load %arg9[%c0_15, %c0_16] : memref<256x1xf32, #tpu.memory_space<vmem>>, vector<256x1xf32>
      %cst_17 = arith.constant dense<0.000000e+00> : vector<32x1xf32>
      %21 = tpu.matmul %19, %20, %cst_17 {dimension_numbers = #tpu.dot_dimension_numbers<[1], [0], [0], [1], [0, 0, 1, 1], [], []>} : vector<32x256xf32>, vector<256x1xf32>, vector<32x1xf32> -> vector<32x1xf32>
      %c0_18 = arith.constant 0 : index
      %c0_19 = arith.constant 0 : index
      %22 = vector.load %arg4[%c0_18, %c0_19] : memref<32x256xf32, #tpu.memory_space<vmem>>, vector<32x256xf32>
      %c0_20 = arith.constant 0 : index
      %c0_21 = arith.constant 0 : index
      %23 = vector.load %arg10[%c0_20, %c0_21] : memref<256x1xf32, #tpu.memory_space<vmem>>, vector<256x1xf32>
      %cst_22 = arith.constant dense<0.000000e+00> : vector<32x1xf32>
      %24 = tpu.matmul %22, %23, %cst_22 {dimension_numbers = #tpu.dot_dimension_numbers<[1], [0], [0], [1], [0, 0, 1, 1], [], []>} : vector<32x256xf32>, vector<256x1xf32>, vector<32x1xf32> -> vector<32x1xf32>
      %cst_23 = arith.constant 2.048000e+03 : f32
      %25 = vector.broadcast %cst_23 : f32 to vector<32x1xf32>
      %26 = arith.divf %21, %25 : vector<32x1xf32>
      %cst_24 = arith.constant 2.048000e+03 : f32
      %27 = vector.broadcast %cst_24 : f32 to vector<32x1xf32>
      %28 = arith.divf %24, %27 : vector<32x1xf32>
      %29 = arith.mulf %26, %26 : vector<32x1xf32>
      %30 = arith.subf %28, %29 : vector<32x1xf32>
      %cst_25 = arith.constant 9.99999974E-6 : f32
      %31 = vector.broadcast %cst_25 : f32 to vector<32x1xf32>
      %32 = arith.addf %30, %31 : vector<32x1xf32>
      %33 = math.rsqrt %32 : vector<32x1xf32>
      %c0_26 = arith.constant 0 : index
      %c0_27 = arith.constant 0 : index
      %34 = vector.load %arg3[%c0_26, %c0_27] : memref<256x32xf32, #tpu.memory_space<vmem>>, vector<256x32xf32>
      %cst_28 = arith.constant dense<0.000000e+00> : vector<256x1xf32>
      %35 = tpu.matmul %34, %26, %cst_28 {dimension_numbers = #tpu.dot_dimension_numbers<[1], [0], [0], [1], [0, 0, 1, 1], [], []>} : vector<256x32xf32>, vector<32x1xf32>, vector<256x1xf32> -> vector<256x1xf32>
      %c0_29 = arith.constant 0 : index
      %c0_30 = arith.constant 0 : index
      %36 = vector.load %arg3[%c0_29, %c0_30] : memref<256x32xf32, #tpu.memory_space<vmem>>, vector<256x32xf32>
      %cst_31 = arith.constant dense<0.000000e+00> : vector<256x1xf32>
      %37 = tpu.matmul %36, %33, %cst_31 {dimension_numbers = #tpu.dot_dimension_numbers<[1], [0], [0], [1], [0, 0, 1, 1], [], []>} : vector<256x32xf32>, vector<32x1xf32>, vector<256x1xf32> -> vector<256x1xf32>
      %c0_32 = arith.constant 0 : index
      %c0_33 = arith.constant 0 : index
      %38 = vector.load %arg5[%c0_32, %c0_33] : memref<256x1xf32, #tpu.memory_space<vmem>>, vector<256x1xf32>
      %39 = arith.mulf %38, %37 : vector<256x1xf32>
      %c0_34 = arith.constant 0 : index
      %c0_35 = arith.constant 0 : index
      %40 = vector.load %arg6[%c0_34, %c0_35] : memref<256x1xf32, #tpu.memory_space<vmem>>, vector<256x1xf32>
      %41 = arith.mulf %35, %39 : vector<256x1xf32>
      %42 = arith.subf %40, %41 : vector<256x1xf32>
      %c0_36 = arith.constant 0 : index
      %c0_37 = arith.constant 0 : index
      %c0_38 = arith.constant 0 : index
      %43 = vector.load %arg7[%c0_36, %c0_37, %c0_38] : memref<1x256x1xf32, #tpu.memory_space<vmem>>, vector<1x256x1xf32>
      %44 = vector.shape_cast %43 : vector<1x256x1xf32> to vector<256x1xf32>
      %45 = vector.shape_cast %39 : vector<256x1xf32> to vector<1x256x1xf32>
      tpu.vector_store %arg7[%c0_36, %c0_37, %c0_38], %45 {strides = array<i32>} : memref<1x256x1xf32, #tpu.memory_space<vmem>>, vector<1x256x1xf32>,
      %c0_39 = arith.constant 0 : index
      %c0_40 = arith.constant 0 : index
      %c0_41 = arith.constant 0 : index
      %46 = vector.load %arg8[%c0_39, %c0_40, %c0_41] : memref<1x256x1xf32, #tpu.memory_space<vmem>>, vector<1x256x1xf32>
      %47 = vector.shape_cast %46 : vector<1x256x1xf32> to vector<256x1xf32>
      %48 = vector.shape_cast %42 : vector<256x1xf32> to vector<1x256x1xf32>
      tpu.vector_store %arg8[%c0_39, %c0_40, %c0_41], %48 {strides = array<i32>} : memref<1x256x1xf32, #tpu.memory_space<vmem>>, vector<1x256x1xf32>,
    } else {
    }
    return
  }
  func.func @transform_0(%arg0: i32, %arg1: i32) -> (i32, i32, i32) {
    %c0_i32 = arith.constant 0 : i32
    %c0_i32_0 = arith.constant 0 : i32
    return %arg0, %c0_i32, %arg1 : i32, i32, i32
  }
  func.func @transform_1(%arg0: i32, %arg1: i32) -> (i32, i32) {
    %c0_i32 = arith.constant 0 : i32
    %c0_i32_0 = arith.constant 0 : i32
    %c0_i32_1 = arith.constant 0 : i32
    return %c0_i32, %c0_i32_0 : i32, i32
  }
  func.func @transform_2(%arg0: i32, %arg1: i32) -> (i32, i32) {
    %c0_i32 = arith.constant 0 : i32
    %c0_i32_0 = arith.constant 0 : i32
    %c0_i32_1 = arith.constant 0 : i32
    return %c0_i32, %c0_i32_0 : i32, i32
  }
  func.func @transform_3(%arg0: i32, %arg1: i32) -> (i32, i32) {
    %c0_i32 = arith.constant 0 : i32
    %c0_i32_0 = arith.constant 0 : i32
    %c0_i32_1 = arith.constant 0 : i32
    return %c0_i32, %c0_i32_0 : i32, i32
  }
  func.func @transform_4(%arg0: i32, %arg1: i32) -> (i32, i32) {
    %c0_i32 = arith.constant 0 : i32
    %c0_i32_0 = arith.constant 0 : i32
    %c0_i32_1 = arith.constant 0 : i32
    return %c0_i32, %c0_i32_0 : i32, i32
  }
  func.func @transform_5(%arg0: i32, %arg1: i32) -> (i32, i32, i32) {
    %c0_i32 = arith.constant 0 : i32
    %c0_i32_0 = arith.constant 0 : i32
    %c0_i32_1 = arith.constant 0 : i32
    return %arg0, %c0_i32, %c0_i32_0 : i32, i32, i32
  }
  func.func @transform_6(%arg0: i32, %arg1: i32) -> (i32, i32, i32) {
    %c0_i32 = arith.constant 0 : i32
    %c0_i32_0 = arith.constant 0 : i32
    %c0_i32_1 = arith.constant 0 : i32
    return %arg0, %c0_i32, %c0_i32_0 : i32, i32, i32
  }
}

</mosaic_0001>

<llo_original>
// kernel: tpu_custom_call.1
$region0: #{tpu_custom_call.1}
  #allocation0 [shape = 'u32[]', space=smem, size = 0x4, offset = 0x4, fixed_abs, tag = 'smem constant byte address 0x4 - core index']
  #allocation1 [shape = 'u32[144,128]{1,0:T(1,128)}', space=vmem, size = 0x12000, scoped, tag = 'internal scratch']
  #allocation2 [shape = 'f32[256,1]{1,0:T(8,128)}', space=vmem, size = 0x20000, scoped, tag = 'scratch operand']
  #allocation3 [shape = 'f32[256,1]{1,0:T(8,128)}', space=vmem, size = 0x20000, scoped, tag = 'scratch operand']
  %s0 = inlined_call_operand.hbm [shape: f32[2,256,256], index: 0, kind: input, shape index: {}]
  %s1 = inlined_call_operand.vmem [shape: f32[256,32], index: 1, kind: input, shape index: {}]
  %s2 = inlined_call_operand.vmem [shape: f32[32,256], index: 2, kind: input, shape index: {}]
  %s3 = inlined_call_operand.vmem [shape: f32[256,1], index: 3, kind: input, shape index: {}]
  %s4 = inlined_call_operand.vmem [shape: f32[256,1], index: 4, kind: input, shape index: {}]
  %s5 = inlined_call_operand.vmem [shape: f32[2,256,1], index: 5, kind: output, shape index: {0}]
  %s6 = inlined_call_operand.vmem [shape: f32[2,256,1], index: 6, kind: output, shape index: {1}]
  %7 = xla_tuple %s5, %s6
  %s8 = sld [smem:[#allocation0]]
  $region73: #{tpu_custom_call.1} parent=0
    _
  %s10 = ssub.s32 1, %s8
  %s11 = scalar_select 0, %s10, %s8
  $region1: #{tpu_custom_call.1} parent=0
    #allocation4 [shape = 'u8[262144]{0}', space=vmem, size = 0x40000, scoped, tag = 'input window, operand 0']
    #allocation5 [shape = 's32[2]{0}', space=sflag, size = 0x8, scoped, tag = 'scoped memory for tpu_custom_call.1']
    %12 = vsyncpa [#allocation5], 0
    %s13 = scalar_lea.sflag [#allocation5], 1
    %14 = vsyncpa %s13, 0
    loop: start=0, step=1, limit=6
    $region2: #{tpu_custom_call.1} parent=1 // loop_pre_header
      _
    $region3: #{tpu_custom_call.1} parent=1 // loop_header
      %s16 = sphi 0, %s20
      %p17 = scmp.ge.s32.totalorder %s16, 6
      %s23 = sphi 0, %s35
      %s24 = sphi 0, %s31
      %s25 = sphi 0, %s23
      %s26 = sphi 0, %s24
      %s27 = sphi 0, %s25
      %s28 = sphi 0, %s26
      %s40 = sphi 0, %s42
      %s43 = sphi 0, %s40
      %s44 = sphi 0, %s43
      %s60 = sphi 0, %s44
      %s64 = sphi 0, %s64
      %s66 = sphi 0, %s64
      %s67 = sphi 0, %s66
      %s81 = sphi 0, %s67
      %s85 = sphi 0, %s85
      %s87 = sphi 0, %s85
      %s88 = sphi 0, %s87
      %s102 = sphi 0, %s88
      %s106 = sphi 0, %s106
      %s108 = sphi 0, %s106
      %s109 = sphi 0, %s108
      %s123 = sphi 0, %s109
      %s127 = sphi 0, %s127
      %s129 = sphi 0, %s127
      %s130 = sphi 0, %s129
      %s144 = sphi 0, %s130
      %s150 = sphi 0, %s152
      %s153 = sphi 0, %s150
      %s154 = sphi 0, %s153
      %s170 = sphi 0, %s154
      %s176 = sphi 0, %s178
      %s179 = sphi 0, %s176
      %s180 = sphi 0, %s179
      %s196 = sphi 0, %s180
    $region4: #{tpu_custom_call.1} parent=1 // loop_header_branch
      %19 = sbr.rel (%p17) target = $region8
    $region5: #{tpu_custom_call.1} parent=1 // loop_body
      %s21 = ssub.s32 %s16, 1
      %s22 = ssub.s32 %s16, 2
      %s29 = sadd.s32 1, %s24
      %p30 = scmp.ge.s32.totalorder %s29, 2
      %s31 = scalar_select %p30, 0, %s29
      %s32 = sadd.s32 1, %s23
      %s33 = scalar_select %p30, %s32, %s23
      %p34 = scmp.ge.s32.totalorder %s33, 2
      %s35 = scalar_select %p34, 0, %s33
      %s36 = ssub.s32 %s23, %s35
      %s37 = ssub.s32 %s24, %s31
      %s38 = sor.u32 %s36, %s37
      %p39 = scmp.eq.s32.totalorder %s38, 0
      %s41 = sadd.s32 %s40, 1
      %s42 = scalar_select %p39, %s40, %s41
      %p45 = pneg %p39
      %p46 = scmp.eq.s32.totalorder %s16, 3
      %p47 = por %p45, %p46
      %p48 = scmp.ne.s32.totalorder %s40, %s43
      %p49 = scmp.eq.s32.totalorder %s16, 0
      %p50 = por %p48, %p49
      %p51 = scmp.ne.s32.totalorder %s40, %s43
      %p52 = scmp.eq.s32.totalorder %s21, 3
      %p53 = por %p51, %p52
      %p54 = scmp.ne.s32.totalorder %s43, %s44
      %p55 = scmp.eq.s32.totalorder %s21, 0
      %p56 = por %p54, %p55
      %p57 = scmp.ne.s32.totalorder %s43, %s44
      %p58 = scmp.eq.s32.totalorder %s22, 3
      %p59 = por %p57, %p58
      %p61 = scmp.ne.s32.totalorder %s44, %s60
      %p62 = scmp.eq.s32.totalorder %s22, 0
      %p63 = por %p61, %p62
      %s65 = sadd.s32 %s64, 1
      %p68 = scmp.eq.s32.totalorder %s16, 3
      %p69 = scmp.ne.s32.totalorder %s64, %s66
      %p70 = scmp.eq.s32.totalorder %s16, 0
      %p71 = por %p69, %p70
      %p72 = scmp.ne.s32.totalorder %s64, %s66
      %p73 = scmp.eq.s32.totalorder %s21, 3
      %p74 = por %p72, %p73
      %p75 = scmp.ne.s32.totalorder %s66, %s67
      %p76 = scmp.eq.s32.totalorder %s21, 0
      %p77 = por %p75, %p76
      %p78 = scmp.ne.s32.totalorder %s66, %s67
      %p79 = scmp.eq.s32.totalorder %s22, 3
      %p80 = por %p78, %p79
      %p82 = scmp.ne.s32.totalorder %s67, %s81
      %p83 = scmp.eq.s32.totalorder %s22, 0
      %p84 = por %p82, %p83
      %s86 = sadd.s32 %s85, 1
      %p89 = scmp.eq.s32.totalorder %s16, 3
      %p90 = scmp.ne.s32.totalorder %s85, %s87
      %p91 = scmp.eq.s32.totalorder %s16, 0
      %p92 = por %p90, %p91
      %p93 = scmp.ne.s32.totalorder %s85, %s87
      %p94 = scmp.eq.s32.totalorder %s21, 3
      %p95 = por %p93, %p94
      %p96 = scmp.ne.s32.totalorder %s87, %s88
      %p97 = scmp.eq.s32.totalorder %s21, 0
      %p98 = por %p96, %p97
      %p99 = scmp.ne.s32.totalorder %s87, %s88
      %p100 = scmp.eq.s32.totalorder %s22, 3
      %p101 = por %p99, %p100
      %p103 = scmp.ne.s32.totalorder %s88, %s102
      %p104 = scmp.eq.s32.totalorder %s22, 0
      %p105 = por %p103, %p104
      %s107 = sadd.s32 %s106, 1
      %p110 = scmp.eq.s32.totalorder %s16, 3
      %p111 = scmp.ne.s32.totalorder %s106, %s108
      %p112 = scmp.eq.s32.totalorder %s16, 0
      %p113 = por %p111, %p112
      %p114 = scmp.ne.s32.totalorder %s106, %s108
      %p115 = scmp.eq.s32.totalorder %s21, 3
      %p116 = por %p114, %p115
      %p117 = scmp.ne.s32.totalorder %s108, %s109
      %p118 = scmp.eq.s32.totalorder %s21, 0
      %p119 = por %p117, %p118
      %p120 = scmp.ne.s32.totalorder %s108, %s109
      %p121 = scmp.eq.s32.totalorder %s22, 3
      %p122 = por %p120, %p121
      %p124 = scmp.ne.s32.totalorder %s109, %s123
      %p125 = scmp.eq.s32.totalorder %s22, 0
      %p126 = por %p124, %p125
      %s128 = sadd.s32 %s127, 1
      %p131 = scmp.eq.s32.totalorder %s16, 3
      %p132 = scmp.ne.s32.totalorder %s127, %s129
      %p133 = scmp.eq.s32.totalorder %s16, 0
      %p134 = por %p132, %p133
      %p135 = scmp.ne.s32.totalorder %s127, %s129
      %p136 = scmp.eq.s32.totalorder %s21, 3
      %p137 = por %p135, %p136
      %p138 = scmp.ne.s32.totalorder %s129, %s130
      %p139 = scmp.eq.s32.totalorder %s21, 0
      %p140 = por %p138, %p139
      %p141 = scmp.ne.s32.totalorder %s129, %s130
      %p142 = scmp.eq.s32.totalorder %s22, 3
      %p143 = por %p141, %p142
      %p145 = scmp.ne.s32.totalorder %s130, %s144
      %p146 = scmp.eq.s32.totalorder %s22, 0
      %p147 = por %p145, %p146
      %s148 = ssub.s32 %s23, %s35
      %p149 = scmp.eq.s32.totalorder %s148, 0
      %s151 = sadd.s32 %s150, 1
      %s152 = scalar_select %p149, %s150, %s151
      %p155 = pneg %p149
      %p156 = scmp.eq.s32.totalorder %s16, 3
      %p157 = por %p155, %p156
      %p158 = scmp.ne.s32.totalorder %s150, %s153
      %p159 = scmp.eq.s32.totalorder %s16, 0
      %p160 = por %p158, %p159
      %p161 = scmp.ne.s32.totalorder %s150, %s153
      %p162 = scmp.eq.s32.totalorder %s21, 3
      %p163 = por %p161, %p162
      %p164 = scmp.ne.s32.totalorder %s153, %s154
      %p165 = scmp.eq.s32.totalorder %s21, 0
      %p166 = por %p164, %p165
      %p167 = scmp.ne.s32.totalorder %s153, %s154
      %p168 = scmp.eq.s32.totalorder %s22, 3
      %p169 = por %p167, %p168
      %p171 = scmp.ne.s32.totalorder %s154, %s170
      %p172 = scmp.eq.s32.totalorder %s22, 0
      %p173 = por %p171, %p172
      %s174 = ssub.s32 %s23, %s35
      %p175 = scmp.eq.s32.totalorder %s174, 0
      %s177 = sadd.s32 %s176, 1
      %s178 = scalar_select %p175, %s176, %s177
      %p181 = pneg %p175
      %p182 = scmp.eq.s32.totalorder %s16, 3
      %p183 = por %p181, %p182
      %p184 = scmp.ne.s32.totalorder %s176, %s179
      %p185 = scmp.eq.s32.totalorder %s16, 0
      %p186 = por %p184, %p185
      %p187 = scmp.ne.s32.totalorder %s176, %s179
      %p188 = scmp.eq.s32.totalorder %s21, 3
      %p189 = por %p187, %p188
      %p190 = scmp.ne.s32.totalorder %s179, %s180
      %p191 = scmp.eq.s32.totalorder %s21, 0
      %p192 = por %p190, %p191
      %p193 = scmp.ne.s32.totalorder %s179, %s180
      %p194 = scmp.eq.s32.totalorder %s22, 3
      %p195 = por %p193, %p194
      %p197 = scmp.ne.s32.totalorder %s180, %s196
      %p198 = scmp.eq.s32.totalorder %s22, 0
      %p199 = por %p197, %p198
      %p200 = scmp.le.s32.totalorder 1, %s16
      %p201 = scmp.lt.s32.totalorder %s16, 5
      %p202 = pnand %p200, %p201
      %p203 = pneg %p202
      // Predicated region
      $region9: #{tpu_custom_call.1} parent=5 // pred_check
        _
      $region10: #{tpu_custom_call.1} parent=5 // pred_check_branch
        %205 = sbr.rel (%p202) target = $region12
      $region11: #{tpu_custom_call.1} parent=5 // pred_region
        %s206 = ssub.s32 %s16, 1
        // Predicated region
        $region13: #{tpu_custom_call.1} parent=11 // pred_check
          %p207 = pneg %p77
        $region14: #{tpu_custom_call.1} parent=11 // pred_check_branch
          %209 = sbr.rel (%p207) target = $region16
        $region15: #{tpu_custom_call.1} parent=11 // pred_region
          _
        $region16: #{tpu_custom_call.1} parent=11 // pred_fallthru
          _
        // Predicated region
        $region17: #{tpu_custom_call.1} parent=11 // pred_check
          %p210 = pneg %p98
        $region18: #{tpu_custom_call.1} parent=11 // pred_check_branch
          %212 = sbr.rel (%p210) target = $region20
        $region19: #{tpu_custom_call.1} parent=11 // pred_region
          _
        $region20: #{tpu_custom_call.1} parent=11 // pred_fallthru
          _
        // Predicated region
        $region21: #{tpu_custom_call.1} parent=11 // pred_check
          %p213 = pneg %p119
        $region22: #{tpu_custom_call.1} parent=11 // pred_check_branch
          %215 = sbr.rel (%p213) target = $region24
        $region23: #{tpu_custom_call.1} parent=11 // pred_region
          _
        $region24: #{tpu_custom_call.1} parent=11 // pred_fallthru
          _
        // Predicated region
        $region25: #{tpu_custom_call.1} parent=11 // pred_check
          %p216 = pneg %p140
        $region26: #{tpu_custom_call.1} parent=11 // pred_check_branch
          %218 = sbr.rel (%p216) target = $region28
        $region27: #{tpu_custom_call.1} parent=11 // pred_region
          _
        $region28: #{tpu_custom_call.1} parent=11 // pred_fallthru
          _
      $region12: #{tpu_custom_call.1} parent=5 // pred_fallthru
        _
      %p219 = scmp.lt.s32.totalorder %s16, 4
      // Predicated region
      $region29: #{tpu_custom_call.1} parent=5 // pred_check
        %p220 = pneg %p219
      $region30: #{tpu_custom_call.1} parent=5 // pred_check_branch
        %222 = sbr.rel (%p220) target = $region32
      $region31: #{tpu_custom_call.1} parent=5 // pred_region
        // Predicated region
        $region33: #{tpu_custom_call.1} parent=31 // pred_check
          %p223 = pneg %p50
        $region34: #{tpu_custom_call.1} parent=31 // pred_check_branch
          %225 = sbr.rel (%p223) target = $region36
        $region35: #{tpu_custom_call.1} parent=31 // pred_region
          %s226 = sand.u32 %s40, 1
          %s227 = scalar_lea.sflag [#allocation5], %s226
          %s228 = sand.u32 %s40, 1
          %s229 = smul.addr %s228, 256
          %s230 = scalar_lea.vmem [#allocation4], %s229
          %s232 = ssub.s32 4096, 4096
          %233 = vsyncadd %s227, %s232
          %s234 = smul.addr %s23, 64
          %s235 = sadd.s32 %s24, %s234
          %s236 = smul.addr %s235, 128
          %s237 = scalar_lea.hbm %s0, %s236
          %s238 = sshll.u32 %s230, 4
          %s239 = int_to_ptr.vmem [resolvable:$true] %s238
          %244 = dma.hbm_to_vmem [thread:$0]  %s237, 4096, %s239, %s227, 256, 128, 8
        $region36: #{tpu_custom_call.1} parent=31 // pred_fallthru
          _
      $region32: #{tpu_custom_call.1} parent=5 // pred_fallthru
        _
      %p245 = scmp.le.s32.totalorder 1, %s16
      %p246 = scmp.lt.s32.totalorder %s16, 5
      %p247 = pnand %p245, %p246
      %p248 = pneg %p247
      // Predicated region
      $region37: #{tpu_custom_call.1} parent=5 // pred_check
        _
      $region38: #{tpu_custom_call.1} parent=5 // pred_check_branch
        %250 = sbr.rel (%p247) target = $region40
      $region39: #{tpu_custom_call.1} parent=5 // pred_region
        %s251 = ssub.s32 %s16, 1
        %s252 = sand.u32 %s43, 1
        %s253 = scalar_lea.sflag [#allocation5], %s252
        %s254 = sand.u32 %s43, 1
        %s255 = smul.addr %s254, 256
        %s256 = scalar_lea.vmem [#allocation4], %s255
        // Predicated region
        $region41: #{tpu_custom_call.1} parent=39 // pred_check
          %p257 = pneg %p56
        $region42: #{tpu_custom_call.1} parent=39 // pred_check_branch
          %259 = sbr.rel (%p257) target = $region44
        $region43: #{tpu_custom_call.1} parent=39 // pred_region
          %260 = dma.done %s253, 4096
        $region44: #{tpu_custom_call.1} parent=39 // pred_fallthru
          _
        %s261 = sand.u32 %s43, 1
        %s262 = scalar_lea.sflag [#allocation5], %s261
        %s263 = sand.u32 %s43, 1
        %s264 = smul.addr %s263, 256
        %s265 = scalar_lea.vmem [#allocation4], %s264
        %p266 = pneg %p56
        %p267 = pneg %p53
        %p268 = pneg %p77
        %p269 = pneg %p74
        %p270 = pneg %p98
        %p271 = pneg %p95
        %p272 = pneg %p119
        %p273 = pneg %p116
        %p274 = pneg %p140
        %p275 = pneg %p137
        %p276 = pneg %p166
        %p277 = pneg %p163
        %p278 = scmp.lt.s32.totalorder %s25, 1
        %s279 = scalar_select %p278, %s25, 1
        %s280 = smul.addr %s279, 32
        %s281 = smul.addr %s280, 8
        %s282 = scalar_lea.vmem %s5, %s281
        %p283 = pneg %p192
        %p284 = pneg %p189
        %p285 = scmp.lt.s32.totalorder %s25, 1
        %s286 = scalar_select %p285, %s25, 1
        %s287 = smul.addr %s286, 32
        %s288 = smul.addr %s287, 8
        %s289 = scalar_lea.vmem %s6, %s288
        %p290 = scmp.lt.s32.totalorder %s25, 1
        %s291 = scalar_select %p290, %s25, 1
        %s292 = smul.addr %s291, 32
        %s293 = smul.addr %s292, 8
        %s294 = scalar_lea.vmem %s5, %s293
        %p295 = scmp.lt.s32.totalorder %s25, 1
        %s296 = scalar_select %p295, %s25, 1
        %s297 = smul.addr %s296, 32
        %s298 = smul.addr %s297, 8
        %s299 = scalar_lea.vmem %s6, %s298
        %p300 = scmp.eq.s32.totalorder %s26, 0
        // Predicated region
        $region45: #{tpu_custom_call.1} parent=39 // pred_check
          %p301 = pneg %p300
        $region46: #{tpu_custom_call.1} parent=39 // pred_check_branch
          %303 = sbr.rel (%p301) target = $region48
        $region47: #{tpu_custom_call.1} parent=39 // pred_region
          %vm304 = vcmask 7168
          %305 = vst.msk [vmem:[#allocation2] sm:$0xff] %vm304, 0.0
          %306 = vst.msk [vmem:[#allocation2 + $0x8] sm:$0xff] %vm304, 0.0
          %307 = vst.msk [vmem:[#allocation2 + $0x10] sm:$0xff] %vm304, 0.0
          %308 = vst.msk [vmem:[#allocation2 + $0x18] sm:$0xff] %vm304, 0.0
          %309 = vst.msk [vmem:[#allocation2 + $0x20] sm:$0xff] %vm304, 0.0
          %310 = vst.msk [vmem:[#allocation2 + $0x28] sm:$0xff] %vm304, 0.0
          %311 = vst.msk [vmem:[#allocation2 + $0x30] sm:$0xff] %vm304, 0.0
          %312 = vst.msk [vmem:[#allocation2 + $0x38] sm:$0xff] %vm304, 0.0
          %313 = vst.msk [vmem:[#allocation2 + $0x40] sm:$0xff] %vm304, 0.0
          %314 = vst.msk [vmem:[#allocation2 + $0x48] sm:$0xff] %vm304, 0.0
          %315 = vst.msk [vmem:[#allocation2 + $0x50] sm:$0xff] %vm304, 0.0
          %316 = vst.msk [vmem:[#allocation2 + $0x58] sm:$0xff] %vm304, 0.0
          %317 = vst.msk [vmem:[#allocation2 + $0x60] sm:$0xff] %vm304, 0.0
          %318 = vst.msk [vmem:[#allocation2 + $0x68] sm:$0xff] %vm304, 0.0
          %319 = vst.msk [vmem:[#allocation2 + $0x70] sm:$0xff] %vm304, 0.0
          %320 = vst.msk [vmem:[#allocation2 + $0x78] sm:$0xff] %vm304, 0.0
          %321 = vst.msk [vmem:[#allocation2 + $0x80] sm:$0xff] %vm304, 0.0
          %322 = vst.msk [vmem:[#allocation2 + $0x88] sm:$0xff] %vm304, 0.0
          %323 = vst.msk [vmem:[#allocation2 + $0x90] sm:$0xff] %vm304, 0.0
          %324 = vst.msk [vmem:[#allocation2 + $0x98] sm:$0xff] %vm304, 0.0
          %325 = vst.msk [vmem:[#allocation2 + $0xa0] sm:$0xff] %vm304, 0.0
          %326 = vst.msk [vmem:[#allocation2 + $0xa8] sm:$0xff] %vm304, 0.0
          %327 = vst.msk [vmem:[#allocation2 + $0xb0] sm:$0xff] %vm304, 0.0
          %328 = vst.msk [vmem:[#allocation2 + $0xb8] sm:$0xff] %vm304, 0.0
          %329 = vst.msk [vmem:[#allocation2 + $0xc0] sm:$0xff] %vm304, 0.0
          %330 = vst.msk [vmem:[#allocation2 + $0xc8] sm:$0xff] %vm304, 0.0
          %331 = vst.msk [vmem:[#allocation2 + $0xd0] sm:$0xff] %vm304, 0.0
          %332 = vst.msk [vmem:[#allocation2 + $0xd8] sm:$0xff] %vm304, 0.0
          %333 = vst.msk [vmem:[#allocation2 + $0xe0] sm:$0xff] %vm304, 0.0
          %334 = vst.msk [vmem:[#allocation2 + $0xe8] sm:$0xff] %vm304, 0.0
          %335 = vst.msk [vmem:[#allocation2 + $0xf0] sm:$0xff] %vm304, 0.0
          %336 = vst.msk [vmem:[#allocation2 + $0xf8] sm:$0xff] %vm304, 0.0
          %337 = vst.msk [vmem:[#allocation3] sm:$0xff] %vm304, 0.0
          %338 = vst.msk [vmem:[#allocation3 + $0x8] sm:$0xff] %vm304, 0.0
          %339 = vst.msk [vmem:[#allocation3 + $0x10] sm:$0xff] %vm304, 0.0
          %340 = vst.msk [vmem:[#allocation3 + $0x18] sm:$0xff] %vm304, 0.0
          %341 = vst.msk [vmem:[#allocation3 + $0x20] sm:$0xff] %vm304, 0.0
          %342 = vst.msk [vmem:[#allocation3 + $0x28] sm:$0xff] %vm304, 0.0
          %343 = vst.msk [vmem:[#allocation3 + $0x30] sm:$0xff] %vm304, 0.0
          %344 = vst.msk [vmem:[#allocation3 + $0x38] sm:$0xff] %vm304, 0.0
          %345 = vst.msk [vmem:[#allocation3 + $0x40] sm:$0xff] %vm304, 0.0
          %346 = vst.msk [vmem:[#allocation3 + $0x48] sm:$0xff] %vm304, 0.0
          %347 = vst.msk [vmem:[#allocation3 + $0x50] sm:$0xff] %vm304, 0.0
          %348 = vst.msk [vmem:[#allocation3 + $0x58] sm:$0xff] %vm304, 0.0
          %349 = vst.msk [vmem:[#allocation3 + $0x60] sm:$0xff] %vm304, 0.0
          %350 = vst.msk [vmem:[#allocation3 + $0x68] sm:$0xff] %vm304, 0.0
          %351 = vst.msk [vmem:[#allocation3 + $0x70] sm:$0xff] %vm304, 0.0
          %352 = vst.msk [vmem:[#allocation3 + $0x78] sm:$0xff] %vm304, 0.0
          %353 = vst.msk [vmem:[#allocation3 + $0x80] sm:$0xff] %vm304, 0.0
          %354 = vst.msk [vmem:[#allocation3 + $0x88] sm:$0xff] %vm304, 0.0
          %355 = vst.msk [vmem:[#allocation3 + $0x90] sm:$0xff] %vm304, 0.0
          %356 = vst.msk [vmem:[#allocation3 + $0x98] sm:$0xff] %vm304, 0.0
          %357 = vst.msk [vmem:[#allocation3 + $0xa0] sm:$0xff] %vm304, 0.0
          %358 = vst.msk [vmem:[#allocation3 + $0xa8] sm:$0xff] %vm304, 0.0
          %359 = vst.msk [vmem:[#allocation3 + $0xb0] sm:$0xff] %vm304, 0.0
          %360 = vst.msk [vmem:[#allocation3 + $0xb8] sm:$0xff] %vm304, 0.0
          %361 = vst.msk [vmem:[#allocation3 + $0xc0] sm:$0xff] %vm304, 0.0
          %362 = vst.msk [vmem:[#allocation3 + $0xc8] sm:$0xff] %vm304, 0.0
          %363 = vst.msk [vmem:[#allocation3 + $0xd0] sm:$0xff] %vm304, 0.0
          %364 = vst.msk [vmem:[#allocation3 + $0xd8] sm:$0xff] %vm304, 0.0
          %365 = vst.msk [vmem:[#allocation3 + $0xe0] sm:$0xff] %vm304, 0.0
          %366 = vst.msk [vmem:[#allocation3 + $0xe8] sm:$0xff] %vm304, 0.0
          %367 = vst.msk [vmem:[#allocation3 + $0xf0] sm:$0xff] %vm304, 0.0
          %368 = vst.msk [vmem:[#allocation3 + $0xf8] sm:$0xff] %vm304, 0.0
        $region48: #{tpu_custom_call.1} parent=39 // pred_fallthru
          _
        %v369 = vld [vmem:[%s256] sm:$0xff]
        %v370 = vld [vmem:[%s256 + $0x8] sm:$0xff]
        %v371 = vld [vmem:[%s256 + $0x10] sm:$0xff]
        %v372 = vld [vmem:[%s256 + $0x18] sm:$0xff]
        %v373 = vld [vmem:[%s256 + $0x20] sm:$0xff]
        %v374 = vld [vmem:[%s256 + $0x28] sm:$0xff]
        %v375 = vld [vmem:[%s256 + $0x30] sm:$0xff]
        %v376 = vld [vmem:[%s256 + $0x38] sm:$0xff]
        %v377 = vld [vmem:[%s256 + $0x40] sm:$0xff]
        %v378 = vld [vmem:[%s256 + $0x48] sm:$0xff]
        %v379 = vld [vmem:[%s256 + $0x50] sm:$0xff]
        %v380 = vld [vmem:[%s256 + $0x58] sm:$0xff]
        %v381 = vld [vmem:[%s256 + $0x60] sm:$0xff]
        %v382 = vld [vmem:[%s256 + $0x68] sm:$0xff]
        %v383 = vld [vmem:[%s256 + $0x70] sm:$0xff]
        %v384 = vld [vmem:[%s256 + $0x78] sm:$0xff]
        %v385 = vld [vmem:[%s256 + $0x80] sm:$0xff]
        %v386 = vld [vmem:[%s256 + $0x88] sm:$0xff]
        %v387 = vld [vmem:[%s256 + $0x90] sm:$0xff]
        %v388 = vld [vmem:[%s256 + $0x98] sm:$0xff]
        %v389 = vld [vmem:[%s256 + $0xa0] sm:$0xff]
        %v390 = vld [vmem:[%s256 + $0xa8] sm:$0xff]
        %v391 = vld [vmem:[%s256 + $0xb0] sm:$0xff]
        %v392 = vld [vmem:[%s256 + $0xb8] sm:$0xff]
        %v393 = vld [vmem:[%s256 + $0xc0] sm:$0xff]
        %v394 = vld [vmem:[%s256 + $0xc8] sm:$0xff]
        %v395 = vld [vmem:[%s256 + $0xd0] sm:$0xff]
        %v396 = vld [vmem:[%s256 + $0xd8] sm:$0xff]
        %v397 = vld [vmem:[%s256 + $0xe0] sm:$0xff]
        %v398 = vld [vmem:[%s256 + $0xe8] sm:$0xff]
        %v399 = vld [vmem:[%s256 + $0xf0] sm:$0xff]
        %v400 = vld [vmem:[%s256 + $0xf8] sm:$0xff]
        %v401 = vld [vmem:[#allocation2] sm:$0xff]
        %v402 = vld [vmem:[#allocation2 + $0x8] sm:$0xff]
        %v403 = vld [vmem:[#allocation2 + $0x10] sm:$0xff]
        %v404 = vld [vmem:[#allocation2 + $0x18] sm:$0xff]
        %v405 = vld [vmem:[#allocation2 + $0x20] sm:$0xff]
        %v406 = vld [vmem:[#allocation2 + $0x28] sm:$0xff]
        %v407 = vld [vmem:[#allocation2 + $0x30] sm:$0xff]
        %v408 = vld [vmem:[#allocation2 + $0x38] sm:$0xff]
        %v409 = vld [vmem:[#allocation2 + $0x40] sm:$0xff]
        %v410 = vld [vmem:[#allocation2 + $0x48] sm:$0xff]
        %v411 = vld [vmem:[#allocation2 + $0x50] sm:$0xff]
        %v412 = vld [vmem:[#allocation2 + $0x58] sm:$0xff]
        %v413 = vld [vmem:[#allocation2 + $0x60] sm:$0xff]
        %v414 = vld [vmem:[#allocation2 + $0x68] sm:$0xff]
        %v415 = vld [vmem:[#allocation2 + $0x70] sm:$0xff]
        %v416 = vld [vmem:[#allocation2 + $0x78] sm:$0xff]
        %v417 = vld [vmem:[#allocation2 + $0x80] sm:$0xff]
        %v418 = vld [vmem:[#allocation2 + $0x88] sm:$0xff]
        %v419 = vld [vmem:[#allocation2 + $0x90] sm:$0xff]
        %v420 = vld [vmem:[#allocation2 + $0x98] sm:$0xff]
        %v421 = vld [vmem:[#allocation2 + $0xa0] sm:$0xff]
        %v422 = vld [vmem:[#allocation2 + $0xa8] sm:$0xff]
        %v423 = vld [vmem:[#allocation2 + $0xb0] sm:$0xff]
        %v424 = vld [vmem:[#allocation2 + $0xb8] sm:$0xff]
        %v425 = vld [vmem:[#allocation2 + $0xc0] sm:$0xff]
        %v426 = vld [vmem:[#allocation2 + $0xc8] sm:$0xff]
        %v427 = vld [vmem:[#allocation2 + $0xd0] sm:$0xff]
        %v428 = vld [vmem:[#allocation2 + $0xd8] sm:$0xff]
        %v429 = vld [vmem:[#allocation2 + $0xe0] sm:$0xff]
        %v430 = vld [vmem:[#allocation2 + $0xe8] sm:$0xff]
        %v431 = vld [vmem:[#allocation2 + $0xf0] sm:$0xff]
        %v432 = vld [vmem:[#allocation2 + $0xf8] sm:$0xff]
        %433 = vadd.xlane.f32.xlu0 %v369
        %v434 = vpop.xlane.xlu0 %433
        %435 = vadd.xlane.f32.xlu0 %v370
        %v436 = vpop.xlane.xlu0 %435
        %437 = vadd.xlane.f32.xlu0 %v371
        %v438 = vpop.xlane.xlu0 %437
        %439 = vadd.xlane.f32.xlu0 %v372
        %v440 = vpop.xlane.xlu0 %439
        %441 = vadd.xlane.f32.xlu0 %v373
        %v442 = vpop.xlane.xlu0 %441
        %443 = vadd.xlane.f32.xlu0 %v374
        %v444 = vpop.xlane.xlu0 %443
        %445 = vadd.xlane.f32.xlu0 %v375
        %v446 = vpop.xlane.xlu0 %445
        %447 = vadd.xlane.f32.xlu0 %v376
        %v448 = vpop.xlane.xlu0 %447
        %449 = vadd.xlane.f32.xlu0 %v377
        %v450 = vpop.xlane.xlu0 %449
        %451 = vadd.xlane.f32.xlu0 %v378
        %v452 = vpop.xlane.xlu0 %451
        %453 = vadd.xlane.f32.xlu0 %v379
        %v454 = vpop.xlane.xlu0 %453
        %455 = vadd.xlane.f32.xlu0 %v380
        %v456 = vpop.xlane.xlu0 %455
        %457 = vadd.xlane.f32.xlu0 %v381
        %v458 = vpop.xlane.xlu0 %457
        %459 = vadd.xlane.f32.xlu0 %v382
        %v460 = vpop.xlane.xlu0 %459
        %461 = vadd.xlane.f32.xlu0 %v383
        %v462 = vpop.xlane.xlu0 %461
        %463 = vadd.xlane.f32.xlu0 %v384
        %v464 = vpop.xlane.xlu0 %463
        %465 = vadd.xlane.f32.xlu0 %v385
        %v466 = vpop.xlane.xlu0 %465
        %467 = vadd.xlane.f32.xlu0 %v386
        %v468 = vpop.xlane.xlu0 %467
        %469 = vadd.xlane.f32.xlu0 %v387
        %v470 = vpop.xlane.xlu0 %469
        %471 = vadd.xlane.f32.xlu0 %v388
        %v472 = vpop.xlane.xlu0 %471
        %473 = vadd.xlane.f32.xlu0 %v389
        %v474 = vpop.xlane.xlu0 %473
        %475 = vadd.xlane.f32.xlu0 %v390
        %v476 = vpop.xlane.xlu0 %475
        %477 = vadd.xlane.f32.xlu0 %v391
        %v478 = vpop.xlane.xlu0 %477
        %479 = vadd.xlane.f32.xlu0 %v392
        %v480 = vpop.xlane.xlu0 %479
        %481 = vadd.xlane.f32.xlu0 %v393
        %v482 = vpop.xlane.xlu0 %481
        %483 = vadd.xlane.f32.xlu0 %v394
        %v484 = vpop.xlane.xlu0 %483
        %485 = vadd.xlane.f32.xlu0 %v395
        %v486 = vpop.xlane.xlu0 %485
        %487 = vadd.xlane.f32.xlu0 %v396
        %v488 = vpop.xlane.xlu0 %487
        %489 = vadd.xlane.f32.xlu0 %v397
        %v490 = vpop.xlane.xlu0 %489
        %491 = vadd.xlane.f32.xlu0 %v398
        %v492 = vpop.xlane.xlu0 %491
        %493 = vadd.xlane.f32.xlu0 %v399
        %v494 = vpop.xlane.xlu0 %493
        %495 = vadd.xlane.f32.xlu0 %v400
        %v496 = vpop.xlane.xlu0 %495
        %v497 = vadd.f32 %v401, %v434
        %v498 = vadd.f32 %v402, %v436
        %v499 = vadd.f32 %v403, %v438
        %v500 = vadd.f32 %v404, %v440
        %v501 = vadd.f32 %v405, %v442
        %v502 = vadd.f32 %v406, %v444
        %v503 = vadd.f32 %v407, %v446
        %v504 = vadd.f32 %v408, %v448
        %v505 = vadd.f32 %v409, %v450
        %v506 = vadd.f32 %v410, %v452
        %v507 = vadd.f32 %v411, %v454
        %v508 = vadd.f32 %v412, %v456
        %v509 = vadd.f32 %v413, %v458
        %v510 = vadd.f32 %v414, %v460
        %v511 = vadd.f32 %v415, %v462
        %v512 = vadd.f32 %v416, %v464
        %v513 = vadd.f32 %v417, %v466
        %v514 = vadd.f32 %v418, %v468
        %v515 = vadd.f32 %v419, %v470
        %v516 = vadd.f32 %v420, %v472
        %v517 = vadd.f32 %v421, %v474
        %v518 = vadd.f32 %v422, %v476
        %v519 = vadd.f32 %v423, %v478
        %v520 = vadd.f32 %v424, %v480
        %v521 = vadd.f32 %v425, %v482
        %v522 = vadd.f32 %v426, %v484
        %v523 = vadd.f32 %v427, %v486
        %v524 = vadd.f32 %v428, %v488
        %v525 = vadd.f32 %v429, %v490
        %v526 = vadd.f32 %v430, %v492
        %v527 = vadd.f32 %v431, %v494
        %v528 = vadd.f32 %v432, %v496
        %vm529 = vcmask 7168
        %530 = vst.msk [vmem:[#allocation2] sm:$0xff] %vm529, %v497
        %531 = vst.msk [vmem:[#allocation2 + $0x8] sm:$0xff] %vm529, %v498
        %532 = vst.msk [vmem:[#allocation2 + $0x10] sm:$0xff] %vm529, %v499
        %533 = vst.msk [vmem:[#allocation2 + $0x18] sm:$0xff] %vm529, %v500
        %534 = vst.msk [vmem:[#allocation2 + $0x20] sm:$0xff] %vm529, %v501
        %535 = vst.msk [vmem:[#allocation2 + $0x28] sm:$0xff] %vm529, %v502
        %536 = vst.msk [vmem:[#allocation2 + $0x30] sm:$0xff] %vm529, %v503
        %537 = vst.msk [vmem:[#allocation2 + $0x38] sm:$0xff] %vm529, %v504
        %538 = vst.msk [vmem:[#allocation2 + $0x40] sm:$0xff] %vm529, %v505
        %539 = vst.msk [vmem:[#allocation2 + $0x48] sm:$0xff] %vm529, %v506
        %540 = vst.msk [vmem:[#allocation2 + $0x50] sm:$0xff] %vm529, %v507
        %541 = vst.msk [vmem:[#allocation2 + $0x58] sm:$0xff] %vm529, %v508
        %542 = vst.msk [vmem:[#allocation2 + $0x60] sm:$0xff] %vm529, %v509
        %543 = vst.msk [vmem:[#allocation2 + $0x68] sm:$0xff] %vm529, %v510
        %544 = vst.msk [vmem:[#allocation2 + $0x70] sm:$0xff] %vm529, %v511
        %545 = vst.msk [vmem:[#allocation2 + $0x78] sm:$0xff] %vm529, %v512
        %546 = vst.msk [vmem:[#allocation2 + $0x80] sm:$0xff] %vm529, %v513
        %547 = vst.msk [vmem:[#allocation2 + $0x88] sm:$0xff] %vm529, %v514
        %548 = vst.msk [vmem:[#allocation2 + $0x90] sm:$0xff] %vm529, %v515
        %549 = vst.msk [vmem:[#allocation2 + $0x98] sm:$0xff] %vm529, %v516
        %550 = vst.msk [vmem:[#allocation2 + $0xa0] sm:$0xff] %vm529, %v517
        %551 = vst.msk [vmem:[#allocation2 + $0xa8] sm:$0xff] %vm529, %v518
        %552 = vst.msk [vmem:[#allocation2 + $0xb0] sm:$0xff] %vm529, %v519
        %553 = vst.msk [vmem:[#allocation2 + $0xb8] sm:$0xff] %vm529, %v520
        %554 = vst.msk [vmem:[#allocation2 + $0xc0] sm:$0xff] %vm529, %v521
        %555 = vst.msk [vmem:[#allocation2 + $0xc8] sm:$0xff] %vm529, %v522
        %556 = vst.msk [vmem:[#allocation2 + $0xd0] sm:$0xff] %vm529, %v523
        %557 = vst.msk [vmem:[#allocation2 + $0xd8] sm:$0xff] %vm529, %v524
        %558 = vst.msk [vmem:[#allocation2 + $0xe0] sm:$0xff] %vm529, %v525
        %559 = vst.msk [vmem:[#allocation2 + $0xe8] sm:$0xff] %vm529, %v526
        %560 = vst.msk [vmem:[#allocation2 + $0xf0] sm:$0xff] %vm529, %v527
        %561 = vst.msk [vmem:[#allocation2 + $0xf8] sm:$0xff] %vm529, %v528
        %v562 = vld [vmem:[#allocation3] sm:$0xff]
        %v563 = vld [vmem:[#allocation3 + $0x8] sm:$0xff]
        %v564 = vld [vmem:[#allocation3 + $0x10] sm:$0xff]
        %v565 = vld [vmem:[#allocation3 + $0x18] sm:$0xff]
        %v566 = vld [vmem:[#allocation3 + $0x20] sm:$0xff]
        %v567 = vld [vmem:[#allocation3 + $0x28] sm:$0xff]
        %v568 = vld [vmem:[#allocation3 + $0x30] sm:$0xff]
        %v569 = vld [vmem:[#allocation3 + $0x38] sm:$0xff]
        %v570 = vld [vmem:[#allocation3 + $0x40] sm:$0xff]
        %v571 = vld [vmem:[#allocation3 + $0x48] sm:$0xff]
        %v572 = vld [vmem:[#allocation3 + $0x50] sm:$0xff]
        %v573 = vld [vmem:[#allocation3 + $0x58] sm:$0xff]
        %v574 = vld [vmem:[#allocation3 + $0x60] sm:$0xff]
        %v575 = vld [vmem:[#allocation3 + $0x68] sm:$0xff]
        %v576 = vld [vmem:[#allocation3 + $0x70] sm:$0xff]
        %v577 = vld [vmem:[#allocation3 + $0x78] sm:$0xff]
        %v578 = vld [vmem:[#allocation3 + $0x80] sm:$0xff]
        %v579 = vld [vmem:[#allocation3 + $0x88] sm:$0xff]
        %v580 = vld [vmem:[#allocation3 + $0x90] sm:$0xff]
        %v581 = vld [vmem:[#allocation3 + $0x98] sm:$0xff]
        %v582 = vld [vmem:[#allocation3 + $0xa0] sm:$0xff]
        %v583 = vld [vmem:[#allocation3 + $0xa8] sm:$0xff]
        %v584 = vld [vmem:[#allocation3 + $0xb0] sm:$0xff]
        %v585 = vld [vmem:[#allocation3 + $0xb8] sm:$0xff]
        %v586 = vld [vmem:[#allocation3 + $0xc0] sm:$0xff]
        %v587 = vld [vmem:[#allocation3 + $0xc8] sm:$0xff]
        %v588 = vld [vmem:[#allocation3 + $0xd0] sm:$0xff]
        %v589 = vld [vmem:[#allocation3 + $0xd8] sm:$0xff]
        %v590 = vld [vmem:[#allocation3 + $0xe0] sm:$0xff]
        %v591 = vld [vmem:[#allocation3 + $0xe8] sm:$0xff]
        %v592 = vld [vmem:[#allocation3 + $0xf0] sm:$0xff]
        %v593 = vld [vmem:[#allocation3 + $0xf8] sm:$0xff]
        %v594 = vmul.f32 %v369, %v369
        %v595 = vmul.f32 %v370, %v370
        %v596 = vmul.f32 %v371, %v371
        %v597 = vmul.f32 %v372, %v372
        %v598 = vmul.f32 %v373, %v373
        %v599 = vmul.f32 %v374, %v374
        %v600 = vmul.f32 %v375, %v375
        %v601 = vmul.f32 %v376, %v376
        %v602 = vmul.f32 %v377, %v377
        %v603 = vmul.f32 %v378, %v378
        %v604 = vmul.f32 %v379, %v379
        %v605 = vmul.f32 %v380, %v380
        %v606 = vmul.f32 %v381, %v381
        %v607 = vmul.f32 %v382, %v382
        %v608 = vmul.f32 %v383, %v383
        %v609 = vmul.f32 %v384, %v384
        %v610 = vmul.f32 %v385, %v385
        %v611 = vmul.f32 %v386, %v386
        %v612 = vmul.f32 %v387, %v387
        %v613 = vmul.f32 %v388, %v388
        %v614 = vmul.f32 %v389, %v389
        %v615 = vmul.f32 %v390, %v390
        %v616 = vmul.f32 %v391, %v391
        %v617 = vmul.f32 %v392, %v392
        %v618 = vmul.f32 %v393, %v393
        %v619 = vmul.f32 %v394, %v394
        %v620 = vmul.f32 %v395, %v395
        %v621 = vmul.f32 %v396, %v396
        %v622 = vmul.f32 %v397, %v397
        %v623 = vmul.f32 %v398, %v398
        %v624 = vmul.f32 %v399, %v399
        %v625 = vmul.f32 %v400, %v400
        %626 = vadd.xlane.f32.xlu0 %v594
        %v627 = vpop.xlane.xlu0 %626
        %628 = vadd.xlane.f32.xlu0 %v595
        %v629 = vpop.xlane.xlu0 %628
        %630 = vadd.xlane.f32.xlu0 %v596
        %v631 = vpop.xlane.xlu0 %630
        %632 = vadd.xlane.f32.xlu0 %v597
        %v633 = vpop.xlane.xlu0 %632
        %634 = vadd.xlane.f32.xlu0 %v598
        %v635 = vpop.xlane.xlu0 %634
        %636 = vadd.xlane.f32.xlu0 %v599
        %v637 = vpop.xlane.xlu0 %636
        %638 = vadd.xlane.f32.xlu0 %v600
        %v639 = vpop.xlane.xlu0 %638
        %640 = vadd.xlane.f32.xlu0 %v601
        %v641 = vpop.xlane.xlu0 %640
        %642 = vadd.xlane.f32.xlu0 %v602
        %v643 = vpop.xlane.xlu0 %642
        %644 = vadd.xlane.f32.xlu0 %v603
        %v645 = vpop.xlane.xlu0 %644
        %646 = vadd.xlane.f32.xlu0 %v604
        %v647 = vpop.xlane.xlu0 %646
        %648 = vadd.xlane.f32.xlu0 %v605
        %v649 = vpop.xlane.xlu0 %648
        %650 = vadd.xlane.f32.xlu0 %v606
        %v651 = vpop.xlane.xlu0 %650
        %652 = vadd.xlane.f32.xlu0 %v607
        %v653 = vpop.xlane.xlu0 %652
        %654 = vadd.xlane.f32.xlu0 %v608
        %v655 = vpop.xlane.xlu0 %654
        %656 = vadd.xlane.f32.xlu0 %v609
        %v657 = vpop.xlane.xlu0 %656
        %658 = vadd.xlane.f32.xlu0 %v610
        %v659 = vpop.xlane.xlu0 %658
        %660 = vadd.xlane.f32.xlu0 %v611
        %v661 = vpop.xlane.xlu0 %660
        %662 = vadd.xlane.f32.xlu0 %v612
        %v663 = vpop.xlane.xlu0 %662
        %664 = vadd.xlane.f32.xlu0 %v613
        %v665 = vpop.xlane.xlu0 %664
        %666 = vadd.xlane.f32.xlu0 %v614
        %v667 = vpop.xlane.xlu0 %666
        %668 = vadd.xlane.f32.xlu0 %v615
        %v669 = vpop.xlane.xlu0 %668
        %670 = vadd.xlane.f32.xlu0 %v616
        %v671 = vpop.xlane.xlu0 %670
        %672 = vadd.xlane.f32.xlu0 %v617
        %v673 = vpop.xlane.xlu0 %672
        %674 = vadd.xlane.f32.xlu0 %v618
        %v675 = vpop.xlane.xlu0 %674
        %676 = vadd.xlane.f32.xlu0 %v619
        %v677 = vpop.xlane.xlu0 %676
        %678 = vadd.xlane.f32.xlu0 %v620
        %v679 = vpop.xlane.xlu0 %678
        %680 = vadd.xlane.f32.xlu0 %v621
        %v681 = vpop.xlane.xlu0 %680
        %682 = vadd.xlane.f32.xlu0 %v622
        %v683 = vpop.xlane.xlu0 %682
        %684 = vadd.xlane.f32.xlu0 %v623
        %v685 = vpop.xlane.xlu0 %684
        %686 = vadd.xlane.f32.xlu0 %v624
        %v687 = vpop.xlane.xlu0 %686
        %688 = vadd.xlane.f32.xlu0 %v625
        %v689 = vpop.xlane.xlu0 %688
        %v690 = vadd.f32 %v562, %v627
        %v691 = vadd.f32 %v563, %v629
        %v692 = vadd.f32 %v564, %v631
        %v693 = vadd.f32 %v565, %v633
        %v694 = vadd.f32 %v566, %v635
        %v695 = vadd.f32 %v567, %v637
        %v696 = vadd.f32 %v568, %v639
        %v697 = vadd.f32 %v569, %v641
        %v698 = vadd.f32 %v570, %v643
        %v699 = vadd.f32 %v571, %v645
        %v700 = vadd.f32 %v572, %v647
        %v701 = vadd.f32 %v573, %v649
        %v702 = vadd.f32 %v574, %v651
        %v703 = vadd.f32 %v575, %v653
        %v704 = vadd.f32 %v576, %v655
        %v705 = vadd.f32 %v577, %v657
        %v706 = vadd.f32 %v578, %v659
        %v707 = vadd.f32 %v579, %v661
        %v708 = vadd.f32 %v580, %v663
        %v709 = vadd.f32 %v581, %v665
        %v710 = vadd.f32 %v582, %v667
        %v711 = vadd.f32 %v583, %v669
        %v712 = vadd.f32 %v584, %v671
        %v713 = vadd.f32 %v585, %v673
        %v714 = vadd.f32 %v586, %v675
        %v715 = vadd.f32 %v587, %v677
        %v716 = vadd.f32 %v588, %v679
        %v717 = vadd.f32 %v589, %v681
        %v718 = vadd.f32 %v590, %v683
        %v719 = vadd.f32 %v591, %v685
        %v720 = vadd.f32 %v592, %v687
        %v721 = vadd.f32 %v593, %v689
        %722 = vst.msk [vmem:[#allocation3] sm:$0xff] %vm529, %v690
        %723 = vst.msk [vmem:[#allocation3 + $0x8] sm:$0xff] %vm529, %v691
        %724 = vst.msk [vmem:[#allocation3 + $0x10] sm:$0xff] %vm529, %v692
        %725 = vst.msk [vmem:[#allocation3 + $0x18] sm:$0xff] %vm529, %v693
        %726 = vst.msk [vmem:[#allocation3 + $0x20] sm:$0xff] %vm529, %v694
        %727 = vst.msk [vmem:[#allocation3 + $0x28] sm:$0xff] %vm529, %v695
        %728 = vst.msk [vmem:[#allocation3 + $0x30] sm:$0xff] %vm529, %v696
        %729 = vst.msk [vmem:[#allocation3 + $0x38] sm:$0xff] %vm529, %v697
        %730 = vst.msk [vmem:[#allocation3 + $0x40] sm:$0xff] %vm529, %v698
        %731 = vst.msk [vmem:[#allocation3 + $0x48] sm:$0xff] %vm529, %v699
        %732 = vst.msk [vmem:[#allocation3 + $0x50] sm:$0xff] %vm529, %v700
        %733 = vst.msk [vmem:[#allocation3 + $0x58] sm:$0xff] %vm529, %v701
        %734 = vst.msk [vmem:[#allocation3 + $0x60] sm:$0xff] %vm529, %v702
        %735 = vst.msk [vmem:[#allocation3 + $0x68] sm:$0xff] %vm529, %v703
        %736 = vst.msk [vmem:[#allocation3 + $0x70] sm:$0xff] %vm529, %v704
        %737 = vst.msk [vmem:[#allocation3 + $0x78] sm:$0xff] %vm529, %v705
        %738 = vst.msk [vmem:[#allocation3 + $0x80] sm:$0xff] %vm529, %v706
        %739 = vst.msk [vmem:[#allocation3 + $0x88] sm:$0xff] %vm529, %v707
        %740 = vst.msk [vmem:[#allocation3 + $0x90] sm:$0xff] %vm529, %v708
        %741 = vst.msk [vmem:[#allocation3 + $0x98] sm:$0xff] %vm529, %v709
        %742 = vst.msk [vmem:[#allocation3 + $0xa0] sm:$0xff] %vm529, %v710
        %743 = vst.msk [vmem:[#allocation3 + $0xa8] sm:$0xff] %vm529, %v711
        %744 = vst.msk [vmem:[#allocation3 + $0xb0] sm:$0xff] %vm529, %v712
        %745 = vst.msk [vmem:[#allocation3 + $0xb8] sm:$0xff] %vm529, %v713
        %746 = vst.msk [vmem:[#allocation3 + $0xc0] sm:$0xff] %vm529, %v714
        %747 = vst.msk [vmem:[#allocation3 + $0xc8] sm:$0xff] %vm529, %v715
        %748 = vst.msk [vmem:[#allocation3 + $0xd0] sm:$0xff] %vm529, %v716
        %749 = vst.msk [vmem:[#allocation3 + $0xd8] sm:$0xff] %vm529, %v717
        %750 = vst.msk [vmem:[#allocation3 + $0xe0] sm:$0xff] %vm529, %v718
        %751 = vst.msk [vmem:[#allocation3 + $0xe8] sm:$0xff] %vm529, %v719
        %752 = vst.msk [vmem:[#allocation3 + $0xf0] sm:$0xff] %vm529, %v720
        %753 = vst.msk [vmem:[#allocation3 + $0xf8] sm:$0xff] %vm529, %v721
        %p754 = scmp.eq.s32.totalorder %s26, 1
        // Predicated region
        $region49: #{tpu_custom_call.1} parent=39 // pred_check
          %p755 = pneg %p754
        $region50: #{tpu_custom_call.1} parent=39 // pred_check_branch
          %757 = sbr.rel (%p755) target = $region52
        $region51: #{tpu_custom_call.1} parent=39 // pred_region
          %v758 = vld [vmem:[%s2] sm:$0xff]
          %v759 = vld [vmem:[%s2 + $0x8] sm:$0xff]
          %v760 = vld [vmem:[%s2 + $0x10] sm:$0xff]
          %v761 = vld [vmem:[%s2 + $0x18] sm:$0xff]
          %v762 = vld [vmem:[%s2 + $0x20] sm:$0xff]
          %v763 = vld [vmem:[%s2 + $0x28] sm:$0xff]
          %v764 = vld [vmem:[%s2 + $0x30] sm:$0xff]
          %v765 = vld [vmem:[%s2 + $0x38] sm:$0xff]
          %v766 = vld [vmem:[#allocation2] sm:$0xff]
          %v767 = vld [vmem:[#allocation2 + $0x8] sm:$0xff]
          %v768 = vld [vmem:[#allocation2 + $0x10] sm:$0xff]
          %v769 = vld [vmem:[#allocation2 + $0x18] sm:$0xff]
          %v770 = vld [vmem:[#allocation2 + $0x20] sm:$0xff]
          %v771 = vld [vmem:[#allocation2 + $0x28] sm:$0xff]
          %v772 = vld [vmem:[#allocation2 + $0x30] sm:$0xff]
          %v773 = vld [vmem:[#allocation2 + $0x38] sm:$0xff]
          %v774 = vld [vmem:[#allocation2 + $0x40] sm:$0xff]
          %v775 = vld [vmem:[#allocation2 + $0x48] sm:$0xff]
          %v776 = vld [vmem:[#allocation2 + $0x50] sm:$0xff]
          %v777 = vld [vmem:[#allocation2 + $0x58] sm:$0xff]
          %v778 = vld [vmem:[#allocation2 + $0x60] sm:$0xff]
          %v779 = vld [vmem:[#allocation2 + $0x68] sm:$0xff]
          %v780 = vld [vmem:[#allocation2 + $0x70] sm:$0xff]
          %v781 = vld [vmem:[#allocation2 + $0x78] sm:$0xff]
          %v782 = vld [vmem:[#allocation2 + $0x80] sm:$0xff]
          %v783 = vld [vmem:[#allocation2 + $0x88] sm:$0xff]
          %v784 = vld [vmem:[#allocation2 + $0x90] sm:$0xff]
          %v785 = vld [vmem:[#allocation2 + $0x98] sm:$0xff]
          %v786 = vld [vmem:[#allocation2 + $0xa0] sm:$0xff]
          %v787 = vld [vmem:[#allocation2 + $0xa8] sm:$0xff]
          %v788 = vld [vmem:[#allocation2 + $0xb0] sm:$0xff]
          %v789 = vld [vmem:[#allocation2 + $0xb8] sm:$0xff]
          %v790 = vld [vmem:[#allocation2 + $0xc0] sm:$0xff]
          %v791 = vld [vmem:[#allocation2 + $0xc8] sm:$0xff]
          %v792 = vld [vmem:[#allocation2 + $0xd0] sm:$0xff]
          %v793 = vld [vmem:[#allocation2 + $0xd8] sm:$0xff]
          %v794 = vld [vmem:[#allocation2 + $0xe0] sm:$0xff]
          %v795 = vld [vmem:[#allocation2 + $0xe8] sm:$0xff]
          %v796 = vld [vmem:[#allocation2 + $0xf0] sm:$0xff]
          %v797 = vld [vmem:[#allocation2 + $0xf8] sm:$0xff]
          %798 = vmatprep.subr.mxu0 0.0
          %799 = vmatpush1.msra.mxu0 %v766
          %800 = vmatprep.subr.mxu0 0.0
          %801 = vmatpush1.msra.mxu0 %v767
          %802 = vmatprep.subr.mxu0 0.0
          %803 = vmatpush1.msra.mxu0 %v768
          %804 = vmatprep.subr.mxu0 0.0
          %805 = vmatpush1.msra.mxu0 %v769
          %806 = vmatprep.subr.mxu0 0.0
          %807 = vmatpush1.msra.mxu0 %v770
          %808 = vmatprep.subr.mxu0 0.0
          %809 = vmatpush1.msra.mxu0 %v771
          %810 = vmatprep.subr.mxu0 0.0
          %811 = vmatpush1.msra.mxu0 %v772
          %812 = vmatprep.subr.mxu0 0.0
          %813 = vmatpush1.msra.mxu0 %v773
          %814 = vmatprep.subr.mxu0 0.0
          %815 = vmatpush1.msra.mxu0 %v774
          %816 = vmatprep.subr.mxu0 0.0
          %817 = vmatpush1.msra.mxu0 %v775
          %818 = vmatprep.subr.mxu0 0.0
          %819 = vmatpush1.msra.mxu0 %v776
          %820 = vmatprep.subr.mxu0 0.0
          %821 = vmatpush1.msra.mxu0 %v777
          %822 = vmatprep.subr.mxu0 0.0
          %823 = vmatpush1.msra.mxu0 %v778
          %824 = vmatprep.subr.mxu0 0.0
          %825 = vmatpush1.msra.mxu0 %v779
          %826 = vmatprep.subr.mxu0 0.0
          %827 = vmatpush1.msra.mxu0 %v780
          %828 = vmatprep.subr.mxu0 0.0
          %829 = vmatpush1.msra.mxu0 %v781
          %830 = vmatprep.subr.mxu0 0.0
          %831 = vmatpush1.msra.mxu0 %v782
          %832 = vmatprep.subr.mxu0 0.0
          %833 = vmatpush1.msra.mxu0 %v783
          %834 = vmatprep.subr.mxu0 0.0
          %835 = vmatpush1.msra.mxu0 %v784
          %836 = vmatprep.subr.mxu0 0.0
          %837 = vmatpush1.msra.mxu0 %v785
          %838 = vmatprep.subr.mxu0 0.0
          %839 = vmatpush1.msra.mxu0 %v786
          %840 = vmatprep.subr.mxu0 0.0
          %841 = vmatpush1.msra.mxu0 %v787
          %842 = vmatprep.subr.mxu0 0.0
          %843 = vmatpush1.msra.mxu0 %v788
          %844 = vmatprep.subr.mxu0 0.0
          %845 = vmatpush1.msra.mxu0 %v789
          %846 = vmatprep.subr.mxu0 0.0
          %847 = vmatpush1.msra.mxu0 %v790
          %848 = vmatprep.subr.mxu0 0.0
          %849 = vmatpush1.msra.mxu0 %v791
          %850 = vmatprep.subr.mxu0 0.0
          %851 = vmatpush1.msra.mxu0 %v792
          %852 = vmatprep.subr.mxu0 0.0
          %853 = vmatpush1.msra.mxu0 %v793
          %854 = vmatprep.subr.mxu0 0.0
          %855 = vmatpush1.msra.mxu0 %v794
          %856 = vmatprep.subr.mxu0 0.0
          %857 = vmatpush1.msra.mxu0 %v795
          %858 = vmatprep.subr.mxu0 0.0
          %859 = vmatpush1.msra.mxu0 %v796
          %860 = vmatprep.subr.mxu0 0.0
          %861 = vmatpush1.msra.mxu0 %v797
          %862 = vmatprep.mubr.f32.mxu0 %v759
          %863 = vmatmul.mubr.f32.gmra.mrb[0].mxu0 %v758
          %v864 = vpop.f32.mrb[0].mxu0
          %v865 = vadd.f32 0.0, %v864
          %v866 = vpop.f32.mrb[0].mxu0
          %867 = vmatprep.mubr.f32.mxu0 %v761
          %868 = vmatmul.mubr.f32.gmra.mrb[0].mxu0 %v760
          %v869 = vpop.f32.mrb[0].mxu0
          %v870 = vadd.f32 0.0, %v869
          %v871 = vpop.f32.mrb[0].mxu0
          %872 = vmatprep.mubr.f32.mxu0 %v763
          %873 = vmatmul.mubr.f32.gmra.mrb[0].mxu0 %v762
          %v874 = vpop.f32.mrb[0].mxu0
          %v875 = vadd.f32 0.0, %v874
          %v876 = vpop.f32.mrb[0].mxu0
          %877 = vmatprep.mubr.f32.mxu0 %v765
          %878 = vmatmul.mubr.f32.gmra.mrb[0].mxu0 %v764
          %v879 = vpop.f32.mrb[0].mxu0
          %v880 = vadd.f32 0.0, %v879
          %v881 = vpop.f32.mrb[0].mxu0
          %882 = vdwg.mxu0
          %v883 = vld [vmem:[#allocation3] sm:$0xff]
          %v884 = vld [vmem:[#allocation3 + $0x8] sm:$0xff]
          %v885 = vld [vmem:[#allocation3 + $0x10] sm:$0xff]
          %v886 = vld [vmem:[#allocation3 + $0x18] sm:$0xff]
          %v887 = vld [vmem:[#allocation3 + $0x20] sm:$0xff]
          %v888 = vld [vmem:[#allocation3 + $0x28] sm:$0xff]
          %v889 = vld [vmem:[#allocation3 + $0x30] sm:$0xff]
          %v890 = vld [vmem:[#allocation3 + $0x38] sm:$0xff]
          %v891 = vld [vmem:[#allocation3 + $0x40] sm:$0xff]
          %v892 = vld [vmem:[#allocation3 + $0x48] sm:$0xff]
          %v893 = vld [vmem:[#allocation3 + $0x50] sm:$0xff]
          %v894 = vld [vmem:[#allocation3 + $0x58] sm:$0xff]
          %v895 = vld [vmem:[#allocation3 + $0x60] sm:$0xff]
          %v896 = vld [vmem:[#allocation3 + $0x68] sm:$0xff]
          %v897 = vld [vmem:[#allocation3 + $0x70] sm:$0xff]
          %v898 = vld [vmem:[#allocation3 + $0x78] sm:$0xff]
          %v899 = vld [vmem:[#allocation3 + $0x80] sm:$0xff]
          %v900 = vld [vmem:[#allocation3 + $0x88] sm:$0xff]
          %v901 = vld [vmem:[#allocation3 + $0x90] sm:$0xff]
          %v902 = vld [vmem:[#allocation3 + $0x98] sm:$0xff]
          %v903 = vld [vmem:[#allocation3 + $0xa0] sm:$0xff]
          %v904 = vld [vmem:[#allocation3 + $0xa8] sm:$0xff]
          %v905 = vld [vmem:[#allocation3 + $0xb0] sm:$0xff]
          %v906 = vld [vmem:[#allocation3 + $0xb8] sm:$0xff]
          %v907 = vld [vmem:[#allocation3 + $0xc0] sm:$0xff]
          %v908 = vld [vmem:[#allocation3 + $0xc8] sm:$0xff]
          %v909 = vld [vmem:[#allocation3 + $0xd0] sm:$0xff]
          %v910 = vld [vmem:[#allocation3 + $0xd8] sm:$0xff]
          %v911 = vld [vmem:[#allocation3 + $0xe0] sm:$0xff]
          %v912 = vld [vmem:[#allocation3 + $0xe8] sm:$0xff]
          %v913 = vld [vmem:[#allocation3 + $0xf0] sm:$0xff]
          %v914 = vld [vmem:[#allocation3 + $0xf8] sm:$0xff]
          %915 = vmatprep.subr.mxu0 0.0
          %916 = vmatpush1.msra.mxu0 %v883
          %917 = vmatprep.subr.mxu0 0.0
          %918 = vmatpush1.msra.mxu0 %v884
          %919 = vmatprep.subr.mxu0 0.0
          %920 = vmatpush1.msra.mxu0 %v885
          %921 = vmatprep.subr.mxu0 0.0
          %922 = vmatpush1.msra.mxu0 %v886
          %923 = vmatprep.subr.mxu0 0.0
          %924 = vmatpush1.msra.mxu0 %v887
          %925 = vmatprep.subr.mxu0 0.0
          %926 = vmatpush1.msra.mxu0 %v888
          %927 = vmatprep.subr.mxu0 0.0
          %928 = vmatpush1.msra.mxu0 %v889
          %929 = vmatprep.subr.mxu0 0.0
          %930 = vmatpush1.msra.mxu0 %v890
          %931 = vmatprep.subr.mxu0 0.0
          %932 = vmatpush1.msra.mxu0 %v891
          %933 = vmatprep.subr.mxu0 0.0
          %934 = vmatpush1.msra.mxu0 %v892
          %935 = vmatprep.subr.mxu0 0.0
          %936 = vmatpush1.msra.mxu0 %v893
          %937 = vmatprep.subr.mxu0 0.0
          %938 = vmatpush1.msra.mxu0 %v894
          %939 = vmatprep.subr.mxu0 0.0
          %940 = vmatpush1.msra.mxu0 %v895
          %941 = vmatprep.subr.mxu0 0.0
          %942 = vmatpush1.msra.mxu0 %v896
          %943 = vmatprep.subr.mxu0 0.0
          %944 = vmatpush1.msra.mxu0 %v897
          %945 = vmatprep.subr.mxu0 0.0
          %946 = vmatpush1.msra.mxu0 %v898
          %947 = vmatprep.subr.mxu0 0.0
          %948 = vmatpush1.msra.mxu0 %v899
          %949 = vmatprep.subr.mxu0 0.0
          %950 = vmatpush1.msra.mxu0 %v900
          %951 = vmatprep.subr.mxu0 0.0
          %952 = vmatpush1.msra.mxu0 %v901
          %953 = vmatprep.subr.mxu0 0.0
          %954 = vmatpush1.msra.mxu0 %v902
          %955 = vmatprep.subr.mxu0 0.0
          %956 = vmatpush1.msra.mxu0 %v903
          %957 = vmatprep.subr.mxu0 0.0
          %958 = vmatpush1.msra.mxu0 %v904
          %959 = vmatprep.subr.mxu0 0.0
          %960 = vmatpush1.msra.mxu0 %v905
          %961 = vmatprep.subr.mxu0 0.0
          %962 = vmatpush1.msra.mxu0 %v906
          %963 = vmatprep.subr.mxu0 0.0
          %964 = vmatpush1.msra.mxu0 %v907
          %965 = vmatprep.subr.mxu0 0.0
          %966 = vmatpush1.msra.mxu0 %v908
          %967 = vmatprep.subr.mxu0 0.0
          %968 = vmatpush1.msra.mxu0 %v909
          %969 = vmatprep.subr.mxu0 0.0
          %970 = vmatpush1.msra.mxu0 %v910
          %971 = vmatprep.subr.mxu0 0.0
          %972 = vmatpush1.msra.mxu0 %v911
          %973 = vmatprep.subr.mxu0 0.0
          %974 = vmatpush1.msra.mxu0 %v912
          %975 = vmatprep.subr.mxu0 0.0
          %976 = vmatpush1.msra.mxu0 %v913
          %977 = vmatprep.subr.mxu0 0.0
          %978 = vmatpush1.msra.mxu0 %v914
          %979 = vmatprep.mubr.f32.mxu0 %v759
          %980 = vmatmul.mubr.f32.gmra.mrb[0].mxu0 %v758
          %v981 = vpop.f32.mrb[0].mxu0
          %v982 = vadd.f32 0.0, %v981
          %v983 = vpop.f32.mrb[0].mxu0
          %984 = vmatprep.mubr.f32.mxu0 %v761
          %985 = vmatmul.mubr.f32.gmra.mrb[0].mxu0 %v760
          %v986 = vpop.f32.mrb[0].mxu0
          %v987 = vadd.f32 0.0, %v986
          %v988 = vpop.f32.mrb[0].mxu0
          %989 = vmatprep.mubr.f32.mxu0 %v763
          %990 = vmatmul.mubr.f32.gmra.mrb[0].mxu0 %v762
          %v991 = vpop.f32.mrb[0].mxu0
          %v992 = vadd.f32 0.0, %v991
          %v993 = vpop.f32.mrb[0].mxu0
          %994 = vmatprep.mubr.f32.mxu0 %v765
          %995 = vmatmul.mubr.f32.gmra.mrb[0].mxu0 %v764
          %v996 = vpop.f32.mrb[0].mxu0
          %v997 = vadd.f32 0.0, %v996
          %v998 = vpop.f32.mrb[0].mxu0
          %999 = vdwg.mxu0
          %v1000 = vrcp.pop 2048.0
          %v1001 = vmul.f32 %v865, %v1000
          %v1002 = vmul.f32 %v870, %v1000
          %v1003 = vmul.f32 %v875, %v1000
          %v1004 = vmul.f32 %v880, %v1000
          %v1005 = vmul.f32 %v982, %v1000
          %v1006 = vmul.f32 %v987, %v1000
          %v1007 = vmul.f32 %v992, %v1000
          %v1008 = vmul.f32 %v997, %v1000
          %v1009 = vmul.f32 %v1001, %v1001
          %v1010 = vmul.f32 %v1002, %v1002
          %v1011 = vmul.f32 %v1003, %v1003
          %v1012 = vmul.f32 %v1004, %v1004
          %v1013 = vsub.f32 %v1005, %v1009
          %v1014 = vsub.f32 %v1006, %v1010
          %v1015 = vsub.f32 %v1007, %v1011
          %v1016 = vsub.f32 %v1008, %v1012
          %v1017 = vadd.f32 %v1013, 1e-05
          %v1018 = vadd.f32 %v1014, 1e-05
          %v1019 = vadd.f32 %v1015, 1e-05
          %v1020 = vadd.f32 %v1016, 1e-05
          %v1021 = vrsqrt.pop %v1017
          %v1022 = vrsqrt.pop %v1018
          %v1023 = vrsqrt.pop %v1019
          %v1024 = vrsqrt.pop %v1020
          %v1025 = vld [vmem:[%s1] sm:$0xff]
          %v1026 = vld [vmem:[%s1 + $0x8] sm:$0xff]
          %v1027 = vld [vmem:[%s1 + $0x10] sm:$0xff]
          %v1028 = vld [vmem:[%s1 + $0x18] sm:$0xff]
          %v1029 = vld [vmem:[%s1 + $0x20] sm:$0xff]
          %v1030 = vld [vmem:[%s1 + $0x28] sm:$0xff]
          %v1031 = vld [vmem:[%s1 + $0x30] sm:$0xff]
          %v1032 = vld [vmem:[%s1 + $0x38] sm:$0xff]
          %v1033 = vld [vmem:[%s1 + $0x40] sm:$0xff]
          %v1034 = vld [vmem:[%s1 + $0x48] sm:$0xff]
          %v1035 = vld [vmem:[%s1 + $0x50] sm:$0xff]
          %v1036 = vld [vmem:[%s1 + $0x58] sm:$0xff]
          %v1037 = vld [vmem:[%s1 + $0x60] sm:$0xff]
          %v1038 = vld [vmem:[%s1 + $0x68] sm:$0xff]
          %v1039 = vld [vmem:[%s1 + $0x70] sm:$0xff]
          %v1040 = vld [vmem:[%s1 + $0x78] sm:$0xff]
          %v1041 = vld [vmem:[%s1 + $0x80] sm:$0xff]
          %v1042 = vld [vmem:[%s1 + $0x88] sm:$0xff]
          %v1043 = vld [vmem:[%s1 + $0x90] sm:$0xff]
          %v1044 = vld [vmem:[%s1 + $0x98] sm:$0xff]
          %v1045 = vld [vmem:[%s1 + $0xa0] sm:$0xff]
          %v1046 = vld [vmem:[%s1 + $0xa8] sm:$0xff]
          %v1047 = vld [vmem:[%s1 + $0xb0] sm:$0xff]
          %v1048 = vld [vmem:[%s1 + $0xb8] sm:$0xff]
          %v1049 = vld [vmem:[%s1 + $0xc0] sm:$0xff]
          %v1050 = vld [vmem:[%s1 + $0xc8] sm:$0xff]
          %v1051 = vld [vmem:[%s1 + $0xd0] sm:$0xff]
          %v1052 = vld [vmem:[%s1 + $0xd8] sm:$0xff]
          %v1053 = vld [vmem:[%s1 + $0xe0] sm:$0xff]
          %v1054 = vld [vmem:[%s1 + $0xe8] sm:$0xff]
          %v1055 = vld [vmem:[%s1 + $0xf0] sm:$0xff]
          %v1056 = vld [vmem:[%s1 + $0xf8] sm:$0xff]
          %vm1057 = vcmask 261120
          %v1059 = vsel %vm1057, %v1025, 0
          %v1062 = vsel %vm1057, %v1026, 0
          %v1065 = vsel %vm1057, %v1027, 0
          %v1068 = vsel %vm1057, %v1028, 0
          %v1071 = vsel %vm1057, %v1029, 0
          %v1074 = vsel %vm1057, %v1030, 0
          %v1077 = vsel %vm1057, %v1031, 0
          %v1080 = vsel %vm1057, %v1032, 0
          %v1083 = vsel %vm1057, %v1033, 0
          %v1086 = vsel %vm1057, %v1034, 0
          %v1089 = vsel %vm1057, %v1035, 0
          %v1092 = vsel %vm1057, %v1036, 0
          %v1095 = vsel %vm1057, %v1037, 0
          %v1098 = vsel %vm1057, %v1038, 0
          %v1101 = vsel %vm1057, %v1039, 0
          %v1104 = vsel %vm1057, %v1040, 0
          %v1107 = vsel %vm1057, %v1041, 0
          %v1110 = vsel %vm1057, %v1042, 0
          %v1113 = vsel %vm1057, %v1043, 0
          %v1116 = vsel %vm1057, %v1044, 0
          %v1119 = vsel %vm1057, %v1045, 0
          %v1122 = vsel %vm1057, %v1046, 0
          %v1125 = vsel %vm1057, %v1047, 0
          %v1128 = vsel %vm1057, %v1048, 0
          %v1131 = vsel %vm1057, %v1049, 0
          %v1134 = vsel %vm1057, %v1050, 0
          %v1137 = vsel %vm1057, %v1051, 0
          %v1140 = vsel %vm1057, %v1052, 0
          %v1143 = vsel %vm1057, %v1053, 0
          %v1146 = vsel %vm1057, %v1054, 0
          %v1149 = vsel %vm1057, %v1055, 0
          %v1152 = vsel %vm1057, %v1056, 0
          %1154 = vmatprep.subr.mxu0 0.0
          %1155 = vmatpush1.msra.mxu0 %v1001
          %1156 = vmatprep.subr.mxu0 0.0
          %1157 = vmatpush1.msra.mxu0 %v1002
          %1158 = vmatprep.subr.mxu0 0.0
          %1159 = vmatpush1.msra.mxu0 %v1003
          %1160 = vmatprep.subr.mxu0 0.0
          %1161 = vmatpush1.msra.mxu0 %v1004
          %1162 = vmatprep.subr.mxu0 0.0
          %1163 = vmatpush1.msra.mxu0 0.0
          %1164 = vmatprep.subr.mxu0 0.0
          %1165 = vmatpush1.msra.mxu0 0.0
          %1166 = vmatprep.subr.mxu0 0.0
          %1167 = vmatpush1.msra.mxu0 0.0
          %1168 = vmatprep.subr.mxu0 0.0
          %1169 = vmatpush1.msra.mxu0 0.0
          %1170 = vmatprep.subr.mxu0 0.0
          %1171 = vmatpush1.msra.mxu0 0.0
          %1172 = vmatprep.subr.mxu0 0.0
          %1173 = vmatpush1.msra.mxu0 0.0
          %1174 = vmatprep.subr.mxu0 0.0
          %1175 = vmatpush1.msra.mxu0 0.0
          %1176 = vmatprep.subr.mxu0 0.0
          %1177 = vmatpush1.msra.mxu0 0.0
          %1178 = vmatprep.subr.mxu0 0.0
          %1179 = vmatpush1.msra.mxu0 0.0
          %1180 = vmatprep.subr.mxu0 0.0
          %1181 = vmatpush1.msra.mxu0 0.0
          %1182 = vmatprep.subr.mxu0 0.0
          %1183 = vmatpush1.msra.mxu0 0.0
          %1184 = vmatprep.subr.mxu0 0.0
          %1185 = vmatpush1.msra.mxu0 0.0
          %1186 = vmatprep.subr.mxu0 0.0
          %1187 = vmatpush1.msra.mxu0 0.0
          %1188 = vmatprep.subr.mxu0 0.0
          %1189 = vmatpush1.msra.mxu0 0.0
          %1190 = vmatprep.subr.mxu0 0.0
          %1191 = vmatpush1.msra.mxu0 0.0
          %1192 = vmatprep.subr.mxu0 0.0
          %1193 = vmatpush1.msra.mxu0 0.0
          %1194 = vmatprep.subr.mxu0 0.0
          %1195 = vmatpush1.msra.mxu0 0.0
          %1196 = vmatprep.subr.mxu0 0.0
          %1197 = vmatpush1.msra.mxu0 0.0
          %1198 = vmatprep.subr.mxu0 0.0
          %1199 = vmatpush1.msra.mxu0 0.0
          %1200 = vmatprep.subr.mxu0 0.0
          %1201 = vmatpush1.msra.mxu0 0.0
          %1202 = vmatprep.subr.mxu0 0.0
          %1203 = vmatpush1.msra.mxu0 0.0
          %1204 = vmatprep.subr.mxu0 0.0
          %1205 = vmatpush1.msra.mxu0 0.0
          %1206 = vmatprep.subr.mxu0 0.0
          %1207 = vmatpush1.msra.mxu0 0.0
          %1208 = vmatprep.subr.mxu0 0.0
          %1209 = vmatpush1.msra.mxu0 0.0
          %1210 = vmatprep.subr.mxu0 0.0
          %1211 = vmatpush1.msra.mxu0 0.0
          %1212 = vmatprep.subr.mxu0 0.0
          %1213 = vmatpush1.msra.mxu0 0.0
          %1214 = vmatprep.subr.mxu0 0.0
          %1215 = vmatpush1.msra.mxu0 0.0
          %1216 = vmatprep.subr.mxu0 0.0
          %1217 = vmatpush1.msra.mxu0 0.0
          %1218 = vmatprep.mubr.f32.mxu0 0.0
          %1219 = vmatmul.mubr.f32.gmra.mrb[0].mxu0 %v1059
          %v1220 = vpop.f32.mrb[0].mxu0
          %v1221 = vadd.f32 0.0, %v1220
          %v1222 = vpop.f32.mrb[0].mxu0
          %1223 = vmatprep.mubr.f32.mxu0 0.0
          %1224 = vmatmul.mubr.f32.gmra.mrb[0].mxu0 %v1062
          %v1225 = vpop.f32.mrb[0].mxu0
          %v1226 = vadd.f32 0.0, %v1225
          %v1227 = vpop.f32.mrb[0].mxu0
          %1228 = vmatprep.mubr.f32.mxu0 0.0
          %1229 = vmatmul.mubr.f32.gmra.mrb[0].mxu0 %v1065
          %v1230 = vpop.f32.mrb[0].mxu0
          %v1231 = vadd.f32 0.0, %v1230
          %v1232 = vpop.f32.mrb[0].mxu0
          %1233 = vmatprep.mubr.f32.mxu0 0.0
          %1234 = vmatmul.mubr.f32.gmra.mrb[0].mxu0 %v1068
          %v1235 = vpop.f32.mrb[0].mxu0
          %v1236 = vadd.f32 0.0, %v1235
          %v1237 = vpop.f32.mrb[0].mxu0
          %1238 = vmatprep.mubr.f32.mxu0 0.0
          %1239 = vmatmul.mubr.f32.gmra.mrb[0].mxu0 %v1071
          %v1240 = vpop.f32.mrb[0].mxu0
          %v1241 = vadd.f32 0.0, %v1240
          %v1242 = vpop.f32.mrb[0].mxu0
          %1243 = vmatprep.mubr.f32.mxu0 0.0
          %1244 = vmatmul.mubr.f32.gmra.mrb[0].mxu0 %v1074
          %v1245 = vpop.f32.mrb[0].mxu0
          %v1246 = vadd.f32 0.0, %v1245
          %v1247 = vpop.f32.mrb[0].mxu0
          %1248 = vmatprep.mubr.f32.mxu0 0.0
          %1249 = vmatmul.mubr.f32.gmra.mrb[0].mxu0 %v1077
          %v1250 = vpop.f32.mrb[0].mxu0
          %v1251 = vadd.f32 0.0, %v1250
          %v1252 = vpop.f32.mrb[0].mxu0
          %1253 = vmatprep.mubr.f32.mxu0 0.0
          %1254 = vmatmul.mubr.f32.gmra.mrb[0].mxu0 %v1080
          %v1255 = vpop.f32.mrb[0].mxu0
          %v1256 = vadd.f32 0.0, %v1255
          %v1257 = vpop.f32.mrb[0].mxu0
          %1258 = vmatprep.mubr.f32.mxu0 0.0
          %1259 = vmatmul.mubr.f32.gmra.mrb[0].mxu0 %v1083
          %v1260 = vpop.f32.mrb[0].mxu0
          %v1261 = vadd.f32 0.0, %v1260
          %v1262 = vpop.f32.mrb[0].mxu0
          %1263 = vmatprep.mubr.f32.mxu0 0.0
          %1264 = vmatmul.mubr.f32.gmra.mrb[0].mxu0 %v1086
          %v1265 = vpop.f32.mrb[0].mxu0
          %v1266 = vadd.f32 0.0, %v1265
          %v1267 = vpop.f32.mrb[0].mxu0
          %1268 = vmatprep.mubr.f32.mxu0 0.0
          %1269 = vmatmul.mubr.f32.gmra.mrb[0].mxu0 %v1089
          %v1270 = vpop.f32.mrb[0].mxu0
          %v1271 = vadd.f32 0.0, %v1270
          %v1272 = vpop.f32.mrb[0].mxu0
          %1273 = vmatprep.mubr.f32.mxu0 0.0
          %1274 = vmatmul.mubr.f32.gmra.mrb[0].mxu0 %v1092
          %v1275 = vpop.f32.mrb[0].mxu0
          %v1276 = vadd.f32 0.0, %v1275
          %v1277 = vpop.f32.mrb[0].mxu0
          %1278 = vmatprep.mubr.f32.mxu0 0.0
          %1279 = vmatmul.mubr.f32.gmra.mrb[0].mxu0 %v1095
          %v1280 = vpop.f32.mrb[0].mxu0
          %v1281 = vadd.f32 0.0, %v1280
          %v1282 = vpop.f32.mrb[0].mxu0
          %1283 = vmatprep.mubr.f32.mxu0 0.0
          %1284 = vmatmul.mubr.f32.gmra.mrb[0].mxu0 %v1098
          %v1285 = vpop.f32.mrb[0].mxu0
          %v1286 = vadd.f32 0.0, %v1285
          %v1287 = vpop.f32.mrb[0].mxu0
          %1288 = vmatprep.mubr.f32.mxu0 0.0
          %1289 = vmatmul.mubr.f32.gmra.mrb[0].mxu0 %v1101
          %v1290 = vpop.f32.mrb[0].mxu0
          %v1291 = vadd.f32 0.0, %v1290
          %v1292 = vpop.f32.mrb[0].mxu0
          %1293 = vmatprep.mubr.f32.mxu0 0.0
          %1294 = vmatmul.mubr.f32.gmra.mrb[0].mxu0 %v1104
          %v1295 = vpop.f32.mrb[0].mxu0
          %v1296 = vadd.f32 0.0, %v1295
          %v1297 = vpop.f32.mrb[0].mxu0
          %1298 = vmatprep.mubr.f32.mxu0 0.0
          %1299 = vmatmul.mubr.f32.gmra.mrb[0].mxu0 %v1107
          %v1300 = vpop.f32.mrb[0].mxu0
          %v1301 = vadd.f32 0.0, %v1300
          %v1302 = vpop.f32.mrb[0].mxu0
          %1303 = vmatprep.mubr.f32.mxu0 0.0
          %1304 = vmatmul.mubr.f32.gmra.mrb[0].mxu0 %v1110
          %v1305 = vpop.f32.mrb[0].mxu0
          %v1306 = vadd.f32 0.0, %v1305
          %v1307 = vpop.f32.mrb[0].mxu0
          %1308 = vmatprep.mubr.f32.mxu0 0.0
          %1309 = vmatmul.mubr.f32.gmra.mrb[0].mxu0 %v1113
          %v1310 = vpop.f32.mrb[0].mxu0
          %v1311 = vadd.f32 0.0, %v1310
          %v1312 = vpop.f32.mrb[0].mxu0
          %1313 = vmatprep.mubr.f32.mxu0 0.0
          %1314 = vmatmul.mubr.f32.gmra.mrb[0].mxu0 %v1116
          %v1315 = vpop.f32.mrb[0].mxu0
          %v1316 = vadd.f32 0.0, %v1315
          %v1317 = vpop.f32.mrb[0].mxu0
          %1318 = vmatprep.mubr.f32.mxu0 0.0
          %1319 = vmatmul.mubr.f32.gmra.mrb[0].mxu0 %v1119
          %v1320 = vpop.f32.mrb[0].mxu0
          %v1321 = vadd.f32 0.0, %v1320
          %v1322 = vpop.f32.mrb[0].mxu0
          %1323 = vmatprep.mubr.f32.mxu0 0.0
          %1324 = vmatmul.mubr.f32.gmra.mrb[0].mxu0 %v1122
          %v1325 = vpop.f32.mrb[0].mxu0
          %v1326 = vadd.f32 0.0, %v1325
          %v1327 = vpop.f32.mrb[0].mxu0
          %1328 = vmatprep.mubr.f32.mxu0 0.0
          %1329 = vmatmul.mubr.f32.gmra.mrb[0].mxu0 %v1125
          %v1330 = vpop.f32.mrb[0].mxu0
          %v1331 = vadd.f32 0.0, %v1330
          %v1332 = vpop.f32.mrb[0].mxu0
          %1333 = vmatprep.mubr.f32.mxu0 0.0
          %1334 = vmatmul.mubr.f32.gmra.mrb[0].mxu0 %v1128
          %v1335 = vpop.f32.mrb[0].mxu0
          %v1336 = vadd.f32 0.0, %v1335
          %v1337 = vpop.f32.mrb[0].mxu0
          %1338 = vmatprep.mubr.f32.mxu0 0.0
          %1339 = vmatmul.mubr.f32.gmra.mrb[0].mxu0 %v1131
          %v1340 = vpop.f32.mrb[0].mxu0
          %v1341 = vadd.f32 0.0, %v1340
          %v1342 = vpop.f32.mrb[0].mxu0
          %1343 = vmatprep.mubr.f32.mxu0 0.0
          %1344 = vmatmul.mubr.f32.gmra.mrb[0].mxu0 %v1134
          %v1345 = vpop.f32.mrb[0].mxu0
          %v1346 = vadd.f32 0.0, %v1345
          %v1347 = vpop.f32.mrb[0].mxu0
          %1348 = vmatprep.mubr.f32.mxu0 0.0
          %1349 = vmatmul.mubr.f32.gmra.mrb[0].mxu0 %v1137
          %v1350 = vpop.f32.mrb[0].mxu0
          %v1351 = vadd.f32 0.0, %v1350
          %v1352 = vpop.f32.mrb[0].mxu0
          %1353 = vmatprep.mubr.f32.mxu0 0.0
          %1354 = vmatmul.mubr.f32.gmra.mrb[0].mxu0 %v1140
          %v1355 = vpop.f32.mrb[0].mxu0
          %v1356 = vadd.f32 0.0, %v1355
          %v1357 = vpop.f32.mrb[0].mxu0
          %1358 = vmatprep.mubr.f32.mxu0 0.0
          %1359 = vmatmul.mubr.f32.gmra.mrb[0].mxu0 %v1143
          %v1360 = vpop.f32.mrb[0].mxu0
          %v1361 = vadd.f32 0.0, %v1360
          %v1362 = vpop.f32.mrb[0].mxu0
          %1363 = vmatprep.mubr.f32.mxu0 0.0
          %1364 = vmatmul.mubr.f32.gmra.mrb[0].mxu0 %v1146
          %v1365 = vpop.f32.mrb[0].mxu0
          %v1366 = vadd.f32 0.0, %v1365
          %v1367 = vpop.f32.mrb[0].mxu0
          %1368 = vmatprep.mubr.f32.mxu0 0.0
          %1369 = vmatmul.mubr.f32.gmra.mrb[0].mxu0 %v1149
          %v1370 = vpop.f32.mrb[0].mxu0
          %v1371 = vadd.f32 0.0, %v1370
          %v1372 = vpop.f32.mrb[0].mxu0
          %1373 = vmatprep.mubr.f32.mxu0 0.0
          %1374 = vmatmul.mubr.f32.gmra.mrb[0].mxu0 %v1152
          %v1375 = vpop.f32.mrb[0].mxu0
          %v1376 = vadd.f32 0.0, %v1375
          %v1377 = vpop.f32.mrb[0].mxu0
          %1378 = vdwg.mxu0
          %1379 = vmatprep.subr.mxu0 0.0
          %1380 = vmatpush1.msra.mxu0 %v1021
          %1381 = vmatprep.subr.mxu0 0.0
          %1382 = vmatpush1.msra.mxu0 %v1022
          %1383 = vmatprep.subr.mxu0 0.0
          %1384 = vmatpush1.msra.mxu0 %v1023
          %1385 = vmatprep.subr.mxu0 0.0
          %1386 = vmatpush1.msra.mxu0 %v1024
          %1387 = vmatprep.subr.mxu0 0.0
          %1388 = vmatpush1.msra.mxu0 0.0
          %1389 = vmatprep.subr.mxu0 0.0
          %1390 = vmatpush1.msra.mxu0 0.0
          %1391 = vmatprep.subr.mxu0 0.0
          %1392 = vmatpush1.msra.mxu0 0.0
          %1393 = vmatprep.subr.mxu0 0.0
          %1394 = vmatpush1.msra.mxu0 0.0
          %1395 = vmatprep.subr.mxu0 0.0
          %1396 = vmatpush1.msra.mxu0 0.0
          %1397 = vmatprep.subr.mxu0 0.0
          %1398 = vmatpush1.msra.mxu0 0.0
          %1399 = vmatprep.subr.mxu0 0.0
          %1400 = vmatpush1.msra.mxu0 0.0
          %1401 = vmatprep.subr.mxu0 0.0
          %1402 = vmatpush1.msra.mxu0 0.0
          %1403 = vmatprep.subr.mxu0 0.0
          %1404 = vmatpush1.msra.mxu0 0.0
          %1405 = vmatprep.subr.mxu0 0.0
          %1406 = vmatpush1.msra.mxu0 0.0
          %1407 = vmatprep.subr.mxu0 0.0
          %1408 = vmatpush1.msra.mxu0 0.0
          %1409 = vmatprep.subr.mxu0 0.0
          %1410 = vmatpush1.msra.mxu0 0.0
          %1411 = vmatprep.subr.mxu0 0.0
          %1412 = vmatpush1.msra.mxu0 0.0
          %1413 = vmatprep.subr.mxu0 0.0
          %1414 = vmatpush1.msra.mxu0 0.0
          %1415 = vmatprep.subr.mxu0 0.0
          %1416 = vmatpush1.msra.mxu0 0.0
          %1417 = vmatprep.subr.mxu0 0.0
          %1418 = vmatpush1.msra.mxu0 0.0
          %1419 = vmatprep.subr.mxu0 0.0
          %1420 = vmatpush1.msra.mxu0 0.0
          %1421 = vmatprep.subr.mxu0 0.0
          %1422 = vmatpush1.msra.mxu0 0.0
          %1423 = vmatprep.subr.mxu0 0.0
          %1424 = vmatpush1.msra.mxu0 0.0
          %1425 = vmatprep.subr.mxu0 0.0
          %1426 = vmatpush1.msra.mxu0 0.0
          %1427 = vmatprep.subr.mxu0 0.0
          %1428 = vmatpush1.msra.mxu0 0.0
          %1429 = vmatprep.subr.mxu0 0.0
          %1430 = vmatpush1.msra.mxu0 0.0
          %1431 = vmatprep.subr.mxu0 0.0
          %1432 = vmatpush1.msra.mxu0 0.0
          %1433 = vmatprep.subr.mxu0 0.0
          %1434 = vmatpush1.msra.mxu0 0.0
          %1435 = vmatprep.subr.mxu0 0.0
          %1436 = vmatpush1.msra.mxu0 0.0
          %1437 = vmatprep.subr.mxu0 0.0
          %1438 = vmatpush1.msra.mxu0 0.0
          %1439 = vmatprep.subr.mxu0 0.0
          %1440 = vmatpush1.msra.mxu0 0.0
          %1441 = vmatprep.subr.mxu0 0.0
          %1442 = vmatpush1.msra.mxu0 0.0
          %1443 = vmatprep.mubr.f32.mxu0 0.0
          %1444 = vmatmul.mubr.f32.gmra.mrb[0].mxu0 %v1059
          %v1445 = vpop.f32.mrb[0].mxu0
          %v1446 = vadd.f32 0.0, %v1445
          %v1447 = vpop.f32.mrb[0].mxu0
          %1448 = vmatprep.mubr.f32.mxu0 0.0
          %1449 = vmatmul.mubr.f32.gmra.mrb[0].mxu0 %v1062
          %v1450 = vpop.f32.mrb[0].mxu0
          %v1451 = vadd.f32 0.0, %v1450
          %v1452 = vpop.f32.mrb[0].mxu0
          %1453 = vmatprep.mubr.f32.mxu0 0.0
          %1454 = vmatmul.mubr.f32.gmra.mrb[0].mxu0 %v1065
          %v1455 = vpop.f32.mrb[0].mxu0
          %v1456 = vadd.f32 0.0, %v1455
          %v1457 = vpop.f32.mrb[0].mxu0
          %1458 = vmatprep.mubr.f32.mxu0 0.0
          %1459 = vmatmul.mubr.f32.gmra.mrb[0].mxu0 %v1068
          %v1460 = vpop.f32.mrb[0].mxu0
          %v1461 = vadd.f32 0.0, %v1460
          %v1462 = vpop.f32.mrb[0].mxu0
          %1463 = vmatprep.mubr.f32.mxu0 0.0
          %1464 = vmatmul.mubr.f32.gmra.mrb[0].mxu0 %v1071
          %v1465 = vpop.f32.mrb[0].mxu0
          %v1466 = vadd.f32 0.0, %v1465
          %v1467 = vpop.f32.mrb[0].mxu0
          %1468 = vmatprep.mubr.f32.mxu0 0.0
          %1469 = vmatmul.mubr.f32.gmra.mrb[0].mxu0 %v1074
          %v1470 = vpop.f32.mrb[0].mxu0
          %v1471 = vadd.f32 0.0, %v1470
          %v1472 = vpop.f32.mrb[0].mxu0
          %1473 = vmatprep.mubr.f32.mxu0 0.0
          %1474 = vmatmul.mubr.f32.gmra.mrb[0].mxu0 %v1077
          %v1475 = vpop.f32.mrb[0].mxu0
          %v1476 = vadd.f32 0.0, %v1475
          %v1477 = vpop.f32.mrb[0].mxu0
          %1478 = vmatprep.mubr.f32.mxu0 0.0
          %1479 = vmatmul.mubr.f32.gmra.mrb[0].mxu0 %v1080
          %v1480 = vpop.f32.mrb[0].mxu0
          %v1481 = vadd.f32 0.0, %v1480
          %v1482 = vpop.f32.mrb[0].mxu0
          %1483 = vmatprep.mubr.f32.mxu0 0.0
          %1484 = vmatmul.mubr.f32.gmra.mrb[0].mxu0 %v1083
          %v1485 = vpop.f32.mrb[0].mxu0
          %v1486 = vadd.f32 0.0, %v1485
          %v1487 = vpop.f32.mrb[0].mxu0
          %1488 = vmatprep.mubr.f32.mxu0 0.0
          %1489 = vmatmul.mubr.f32.gmra.mrb[0].mxu0 %v1086
          %v1490 = vpop.f32.mrb[0].mxu0
          %v1491 = vadd.f32 0.0, %v1490
          %v1492 = vpop.f32.mrb[0].mxu0
          %1493 = vmatprep.mubr.f32.mxu0 0.0
          %1494 = vmatmul.mubr.f32.gmra.mrb[0].mxu0 %v1089
          %v1495 = vpop.f32.mrb[0].mxu0
          %v1496 = vadd.f32 0.0, %v1495
          %v1497 = vpop.f32.mrb[0].mxu0
          %1498 = vmatprep.mubr.f32.mxu0 0.0
          %1499 = vmatmul.mubr.f32.gmra.mrb[0].mxu0 %v1092
          %v1500 = vpop.f32.mrb[0].mxu0
          %v1501 = vadd.f32 0.0, %v1500
          %v1502 = vpop.f32.mrb[0].mxu0
          %1503 = vmatprep.mubr.f32.mxu0 0.0
          %1504 = vmatmul.mubr.f32.gmra.mrb[0].mxu0 %v1095
          %v1505 = vpop.f32.mrb[0].mxu0
          %v1506 = vadd.f32 0.0, %v1505
          %v1507 = vpop.f32.mrb[0].mxu0
          %1508 = vmatprep.mubr.f32.mxu0 0.0
          %1509 = vmatmul.mubr.f32.gmra.mrb[0].mxu0 %v1098
          %v1510 = vpop.f32.mrb[0].mxu0
          %v1511 = vadd.f32 0.0, %v1510
          %v1512 = vpop.f32.mrb[0].mxu0
          %1513 = vmatprep.mubr.f32.mxu0 0.0
          %1514 = vmatmul.mubr.f32.gmra.mrb[0].mxu0 %v1101
          %v1515 = vpop.f32.mrb[0].mxu0
          %v1516 = vadd.f32 0.0, %v1515
          %v1517 = vpop.f32.mrb[0].mxu0
          %1518 = vmatprep.mubr.f32.mxu0 0.0
          %1519 = vmatmul.mubr.f32.gmra.mrb[0].mxu0 %v1104
          %v1520 = vpop.f32.mrb[0].mxu0
          %v1521 = vadd.f32 0.0, %v1520
          %v1522 = vpop.f32.mrb[0].mxu0
          %1523 = vmatprep.mubr.f32.mxu0 0.0
          %1524 = vmatmul.mubr.f32.gmra.mrb[0].mxu0 %v1107
          %v1525 = vpop.f32.mrb[0].mxu0
          %v1526 = vadd.f32 0.0, %v1525
          %v1527 = vpop.f32.mrb[0].mxu0
          %1528 = vmatprep.mubr.f32.mxu0 0.0
          %1529 = vmatmul.mubr.f32.gmra.mrb[0].mxu0 %v1110
          %v1530 = vpop.f32.mrb[0].mxu0
          %v1531 = vadd.f32 0.0, %v1530
          %v1532 = vpop.f32.mrb[0].mxu0
          %1533 = vmatprep.mubr.f32.mxu0 0.0
          %1534 = vmatmul.mubr.f32.gmra.mrb[0].mxu0 %v1113
          %v1535 = vpop.f32.mrb[0].mxu0
          %v1536 = vadd.f32 0.0, %v1535
          %v1537 = vpop.f32.mrb[0].mxu0
          %1538 = vmatprep.mubr.f32.mxu0 0.0
          %1539 = vmatmul.mubr.f32.gmra.mrb[0].mxu0 %v1116
          %v1540 = vpop.f32.mrb[0].mxu0
          %v1541 = vadd.f32 0.0, %v1540
          %v1542 = vpop.f32.mrb[0].mxu0
          %1543 = vmatprep.mubr.f32.mxu0 0.0
          %1544 = vmatmul.mubr.f32.gmra.mrb[0].mxu0 %v1119
          %v1545 = vpop.f32.mrb[0].mxu0
          %v1546 = vadd.f32 0.0, %v1545
          %v1547 = vpop.f32.mrb[0].mxu0
          %1548 = vmatprep.mubr.f32.mxu0 0.0
          %1549 = vmatmul.mubr.f32.gmra.mrb[0].mxu0 %v1122
          %v1550 = vpop.f32.mrb[0].mxu0
          %v1551 = vadd.f32 0.0, %v1550
          %v1552 = vpop.f32.mrb[0].mxu0
          %1553 = vmatprep.mubr.f32.mxu0 0.0
          %1554 = vmatmul.mubr.f32.gmra.mrb[0].mxu0 %v1125
          %v1555 = vpop.f32.mrb[0].mxu0
          %v1556 = vadd.f32 0.0, %v1555
          %v1557 = vpop.f32.mrb[0].mxu0
          %1558 = vmatprep.mubr.f32.mxu0 0.0
          %1559 = vmatmul.mubr.f32.gmra.mrb[0].mxu0 %v1128
          %v1560 = vpop.f32.mrb[0].mxu0
          %v1561 = vadd.f32 0.0, %v1560
          %v1562 = vpop.f32.mrb[0].mxu0
          %1563 = vmatprep.mubr.f32.mxu0 0.0
          %1564 = vmatmul.mubr.f32.gmra.mrb[0].mxu0 %v1131
          %v1565 = vpop.f32.mrb[0].mxu0
          %v1566 = vadd.f32 0.0, %v1565
          %v1567 = vpop.f32.mrb[0].mxu0
          %1568 = vmatprep.mubr.f32.mxu0 0.0
          %1569 = vmatmul.mubr.f32.gmra.mrb[0].mxu0 %v1134
          %v1570 = vpop.f32.mrb[0].mxu0
          %v1571 = vadd.f32 0.0, %v1570
          %v1572 = vpop.f32.mrb[0].mxu0
          %1573 = vmatprep.mubr.f32.mxu0 0.0
          %1574 = vmatmul.mubr.f32.gmra.mrb[0].mxu0 %v1137
          %v1575 = vpop.f32.mrb[0].mxu0
          %v1576 = vadd.f32 0.0, %v1575
          %v1577 = vpop.f32.mrb[0].mxu0
          %1578 = vmatprep.mubr.f32.mxu0 0.0
          %1579 = vmatmul.mubr.f32.gmra.mrb[0].mxu0 %v1140
          %v1580 = vpop.f32.mrb[0].mxu0
          %v1581 = vadd.f32 0.0, %v1580
          %v1582 = vpop.f32.mrb[0].mxu0
          %1583 = vmatprep.mubr.f32.mxu0 0.0
          %1584 = vmatmul.mubr.f32.gmra.mrb[0].mxu0 %v1143
          %v1585 = vpop.f32.mrb[0].mxu0
          %v1586 = vadd.f32 0.0, %v1585
          %v1587 = vpop.f32.mrb[0].mxu0
          %1588 = vmatprep.mubr.f32.mxu0 0.0
          %1589 = vmatmul.mubr.f32.gmra.mrb[0].mxu0 %v1146
          %v1590 = vpop.f32.mrb[0].mxu0
          %v1591 = vadd.f32 0.0, %v1590
          %v1592 = vpop.f32.mrb[0].mxu0
          %1593 = vmatprep.mubr.f32.mxu0 0.0
          %1594 = vmatmul.mubr.f32.gmra.mrb[0].mxu0 %v1149
          %v1595 = vpop.f32.mrb[0].mxu0
          %v1596 = vadd.f32 0.0, %v1595
          %v1597 = vpop.f32.mrb[0].mxu0
          %1598 = vmatprep.mubr.f32.mxu0 0.0
          %1599 = vmatmul.mubr.f32.gmra.mrb[0].mxu0 %v1152
          %v1600 = vpop.f32.mrb[0].mxu0
          %v1601 = vadd.f32 0.0, %v1600
          %v1602 = vpop.f32.mrb[0].mxu0
          %1603 = vdwg.mxu0
          %v1604 = vld [vmem:[%s3] sm:$0xff]
          %v1605 = vld [vmem:[%s3 + $0x8] sm:$0xff]
          %v1606 = vld [vmem:[%s3 + $0x10] sm:$0xff]
          %v1607 = vld [vmem:[%s3 + $0x18] sm:$0xff]
          %v1608 = vld [vmem:[%s3 + $0x20] sm:$0xff]
          %v1609 = vld [vmem:[%s3 + $0x28] sm:$0xff]
          %v1610 = vld [vmem:[%s3 + $0x30] sm:$0xff]
          %v1611 = vld [vmem:[%s3 + $0x38] sm:$0xff]
          %v1612 = vld [vmem:[%s3 + $0x40] sm:$0xff]
          %v1613 = vld [vmem:[%s3 + $0x48] sm:$0xff]
          %v1614 = vld [vmem:[%s3 + $0x50] sm:$0xff]
          %v1615 = vld [vmem:[%s3 + $0x58] sm:$0xff]
          %v1616 = vld [vmem:[%s3 + $0x60] sm:$0xff]
          %v1617 = vld [vmem:[%s3 + $0x68] sm:$0xff]
          %v1618 = vld [vmem:[%s3 + $0x70] sm:$0xff]
          %v1619 = vld [vmem:[%s3 + $0x78] sm:$0xff]
          %v1620 = vld [vmem:[%s3 + $0x80] sm:$0xff]
          %v1621 = vld [vmem:[%s3 + $0x88] sm:$0xff]
          %v1622 = vld [vmem:[%s3 + $0x90] sm:$0xff]
          %v1623 = vld [vmem:[%s3 + $0x98] sm:$0xff]
          %v1624 = vld [vmem:[%s3 + $0xa0] sm:$0xff]
          %v1625 = vld [vmem:[%s3 + $0xa8] sm:$0xff]
          %v1626 = vld [vmem:[%s3 + $0xb0] sm:$0xff]
          %v1627 = vld [vmem:[%s3 + $0xb8] sm:$0xff]
          %v1628 = vld [vmem:[%s3 + $0xc0] sm:$0xff]
          %v1629 = vld [vmem:[%s3 + $0xc8] sm:$0xff]
          %v1630 = vld [vmem:[%s3 + $0xd0] sm:$0xff]
          %v1631 = vld [vmem:[%s3 + $0xd8] sm:$0xff]
          %v1632 = vld [vmem:[%s3 + $0xe0] sm:$0xff]
          %v1633 = vld [vmem:[%s3 + $0xe8] sm:$0xff]
          %v1634 = vld [vmem:[%s3 + $0xf0] sm:$0xff]
          %v1635 = vld [vmem:[%s3 + $0xf8] sm:$0xff]
          %v1636 = vmul.f32 %v1604, %v1446
          %v1637 = vmul.f32 %v1605, %v1451
          %v1638 = vmul.f32 %v1606, %v1456
          %v1639 = vmul.f32 %v1607, %v1461
          %v1640 = vmul.f32 %v1608, %v1466
          %v1641 = vmul.f32 %v1609, %v1471
          %v1642 = vmul.f32 %v1610, %v1476
          %v1643 = vmul.f32 %v1611, %v1481
          %v1644 = vmul.f32 %v1612, %v1486
          %v1645 = vmul.f32 %v1613, %v1491
          %v1646 = vmul.f32 %v1614, %v1496
          %v1647 = vmul.f32 %v1615, %v1501
          %v1648 = vmul.f32 %v1616, %v1506
          %v1649 = vmul.f32 %v1617, %v1511
          %v1650 = vmul.f32 %v1618, %v1516
          %v1651 = vmul.f32 %v1619, %v1521
          %v1652 = vmul.f32 %v1620, %v1526
          %v1653 = vmul.f32 %v1621, %v1531
          %v1654 = vmul.f32 %v1622, %v1536
          %v1655 = vmul.f32 %v1623, %v1541
          %v1656 = vmul.f32 %v1624, %v1546
          %v1657 = vmul.f32 %v1625, %v1551
          %v1658 = vmul.f32 %v1626, %v1556
          %v1659 = vmul.f32 %v1627, %v1561
          %v1660 = vmul.f32 %v1628, %v1566
          %v1661 = vmul.f32 %v1629, %v1571
          %v1662 = vmul.f32 %v1630, %v1576
          %v1663 = vmul.f32 %v1631, %v1581
          %v1664 = vmul.f32 %v1632, %v1586
          %v1665 = vmul.f32 %v1633, %v1591
          %v1666 = vmul.f32 %v1634, %v1596
          %v1667 = vmul.f32 %v1635, %v1601
          %v1668 = vld [vmem:[%s4] sm:$0xff]
          %v1669 = vld [vmem:[%s4 + $0x8] sm:$0xff]
          %v1670 = vld [vmem:[%s4 + $0x10] sm:$0xff]
          %v1671 = vld [vmem:[%s4 + $0x18] sm:$0xff]
          %v1672 = vld [vmem:[%s4 + $0x20] sm:$0xff]
          %v1673 = vld [vmem:[%s4 + $0x28] sm:$0xff]
          %v1674 = vld [vmem:[%s4 + $0x30] sm:$0xff]
          %v1675 = vld [vmem:[%s4 + $0x38] sm:$0xff]
          %v1676 = vld [vmem:[%s4 + $0x40] sm:$0xff]
          %v1677 = vld [vmem:[%s4 + $0x48] sm:$0xff]
          %v1678 = vld [vmem:[%s4 + $0x50] sm:$0xff]
          %v1679 = vld [vmem:[%s4 + $0x58] sm:$0xff]
          %v1680 = vld [vmem:[%s4 + $0x60] sm:$0xff]
          %v1681 = vld [vmem:[%s4 + $0x68] sm:$0xff]
          %v1682 = vld [vmem:[%s4 + $0x70] sm:$0xff]
          %v1683 = vld [vmem:[%s4 + $0x78] sm:$0xff]
          %v1684 = vld [vmem:[%s4 + $0x80] sm:$0xff]
          %v1685 = vld [vmem:[%s4 + $0x88] sm:$0xff]
          %v1686 = vld [vmem:[%s4 + $0x90] sm:$0xff]
          %v1687 = vld [vmem:[%s4 + $0x98] sm:$0xff]
          %v1688 = vld [vmem:[%s4 + $0xa0] sm:$0xff]
          %v1689 = vld [vmem:[%s4 + $0xa8] sm:$0xff]
          %v1690 = vld [vmem:[%s4 + $0xb0] sm:$0xff]
          %v1691 = vld [vmem:[%s4 + $0xb8] sm:$0xff]
          %v1692 = vld [vmem:[%s4 + $0xc0] sm:$0xff]
          %v1693 = vld [vmem:[%s4 + $0xc8] sm:$0xff]
          %v1694 = vld [vmem:[%s4 + $0xd0] sm:$0xff]
          %v1695 = vld [vmem:[%s4 + $0xd8] sm:$0xff]
          %v1696 = vld [vmem:[%s4 + $0xe0] sm:$0xff]
          %v1697 = vld [vmem:[%s4 + $0xe8] sm:$0xff]
          %v1698 = vld [vmem:[%s4 + $0xf0] sm:$0xff]
          %v1699 = vld [vmem:[%s4 + $0xf8] sm:$0xff]
          %v1700 = vmul.f32 %v1221, %v1636
          %v1701 = vmul.f32 %v1226, %v1637
          %v1702 = vmul.f32 %v1231, %v1638
          %v1703 = vmul.f32 %v1236, %v1639
          %v1704 = vmul.f32 %v1241, %v1640
          %v1705 = vmul.f32 %v1246, %v1641
          %v1706 = vmul.f32 %v1251, %v1642
          %v1707 = vmul.f32 %v1256, %v1643
          %v1708 = vmul.f32 %v1261, %v1644
          %v1709 = vmul.f32 %v1266, %v1645
          %v1710 = vmul.f32 %v1271, %v1646
          %v1711 = vmul.f32 %v1276, %v1647
          %v1712 = vmul.f32 %v1281, %v1648
          %v1713 = vmul.f32 %v1286, %v1649
          %v1714 = vmul.f32 %v1291, %v1650
          %v1715 = vmul.f32 %v1296, %v1651
          %v1716 = vmul.f32 %v1301, %v1652
          %v1717 = vmul.f32 %v1306, %v1653
          %v1718 = vmul.f32 %v1311, %v1654
          %v1719 = vmul.f32 %v1316, %v1655
          %v1720 = vmul.f32 %v1321, %v1656
          %v1721 = vmul.f32 %v1326, %v1657
          %v1722 = vmul.f32 %v1331, %v1658
          %v1723 = vmul.f32 %v1336, %v1659
          %v1724 = vmul.f32 %v1341, %v1660
          %v1725 = vmul.f32 %v1346, %v1661
          %v1726 = vmul.f32 %v1351, %v1662
          %v1727 = vmul.f32 %v1356, %v1663
          %v1728 = vmul.f32 %v1361, %v1664
          %v1729 = vmul.f32 %v1366, %v1665
          %v1730 = vmul.f32 %v1371, %v1666
          %v1731 = vmul.f32 %v1376, %v1667
          %v1732 = vsub.f32 %v1668, %v1700
          %v1733 = vsub.f32 %v1669, %v1701
          %v1734 = vsub.f32 %v1670, %v1702
          %v1735 = vsub.f32 %v1671, %v1703
          %v1736 = vsub.f32 %v1672, %v1704
          %v1737 = vsub.f32 %v1673, %v1705
          %v1738 = vsub.f32 %v1674, %v1706
          %v1739 = vsub.f32 %v1675, %v1707
          %v1740 = vsub.f32 %v1676, %v1708
          %v1741 = vsub.f32 %v1677, %v1709
          %v1742 = vsub.f32 %v1678, %v1710
          %v1743 = vsub.f32 %v1679, %v1711
          %v1744 = vsub.f32 %v1680, %v1712
          %v1745 = vsub.f32 %v1681, %v1713
          %v1746 = vsub.f32 %v1682, %v1714
          %v1747 = vsub.f32 %v1683, %v1715
          %v1748 = vsub.f32 %v1684, %v1716
          %v1749 = vsub.f32 %v1685, %v1717
          %v1750 = vsub.f32 %v1686, %v1718
          %v1751 = vsub.f32 %v1687, %v1719
          %v1752 = vsub.f32 %v1688, %v1720
          %v1753 = vsub.f32 %v1689, %v1721
          %v1754 = vsub.f32 %v1690, %v1722
          %v1755 = vsub.f32 %v1691, %v1723
          %v1756 = vsub.f32 %v1692, %v1724
          %v1757 = vsub.f32 %v1693, %v1725
          %v1758 = vsub.f32 %v1694, %v1726
          %v1759 = vsub.f32 %v1695, %v1727
          %v1760 = vsub.f32 %v1696, %v1728
          %v1761 = vsub.f32 %v1697, %v1729
          %v1762 = vsub.f32 %v1698, %v1730
          %v1763 = vsub.f32 %v1699, %v1731
          %1764 = vst.msk [vmem:[%s294] sm:$0xff] %vm529, %v1636
          %1765 = vst.msk [vmem:[%s294 + $0x8] sm:$0xff] %vm529, %v1637
          %1766 = vst.msk [vmem:[%s294 + $0x10] sm:$0xff] %vm529, %v1638
          %1767 = vst.msk [vmem:[%s294 + $0x18] sm:$0xff] %vm529, %v1639
          %1768 = vst.msk [vmem:[%s294 + $0x20] sm:$0xff] %vm529, %v1640
          %1769 = vst.msk [vmem:[%s294 + $0x28] sm:$0xff] %vm529, %v1641
          %1770 = vst.msk [vmem:[%s294 + $0x30] sm:$0xff] %vm529, %v1642
          %1771 = vst.msk [vmem:[%s294 + $0x38] sm:$0xff] %vm529, %v1643
          %1772 = vst.msk [vmem:[%s294 + $0x40] sm:$0xff] %vm529, %v1644
          %1773 = vst.msk [vmem:[%s294 + $0x48] sm:$0xff] %vm529, %v1645
          %1774 = vst.msk [vmem:[%s294 + $0x50] sm:$0xff] %vm529, %v1646
          %1775 = vst.msk [vmem:[%s294 + $0x58] sm:$0xff] %vm529, %v1647
          %1776 = vst.msk [vmem:[%s294 + $0x60] sm:$0xff] %vm529, %v1648
          %1777 = vst.msk [vmem:[%s294 + $0x68] sm:$0xff] %vm529, %v1649
          %1778 = vst.msk [vmem:[%s294 + $0x70] sm:$0xff] %vm529, %v1650
          %1779 = vst.msk [vmem:[%s294 + $0x78] sm:$0xff] %vm529, %v1651
          %1780 = vst.msk [vmem:[%s294 + $0x80] sm:$0xff] %vm529, %v1652
          %1781 = vst.msk [vmem:[%s294 + $0x88] sm:$0xff] %vm529, %v1653
          %1782 = vst.msk [vmem:[%s294 + $0x90] sm:$0xff] %vm529, %v1654
          %1783 = vst.msk [vmem:[%s294 + $0x98] sm:$0xff] %vm529, %v1655
          %1784 = vst.msk [vmem:[%s294 + $0xa0] sm:$0xff] %vm529, %v1656
          %1785 = vst.msk [vmem:[%s294 + $0xa8] sm:$0xff] %vm529, %v1657
          %1786 = vst.msk [vmem:[%s294 + $0xb0] sm:$0xff] %vm529, %v1658
          %1787 = vst.msk [vmem:[%s294 + $0xb8] sm:$0xff] %vm529, %v1659
          %1788 = vst.msk [vmem:[%s294 + $0xc0] sm:$0xff] %vm529, %v1660
          %1789 = vst.msk [vmem:[%s294 + $0xc8] sm:$0xff] %vm529, %v1661
          %1790 = vst.msk [vmem:[%s294 + $0xd0] sm:$0xff] %vm529, %v1662
          %1791 = vst.msk [vmem:[%s294 + $0xd8] sm:$0xff] %vm529, %v1663
          %1792 = vst.msk [vmem:[%s294 + $0xe0] sm:$0xff] %vm529, %v1664
          %1793 = vst.msk [vmem:[%s294 + $0xe8] sm:$0xff] %vm529, %v1665
          %1794 = vst.msk [vmem:[%s294 + $0xf0] sm:$0xff] %vm529, %v1666
          %1795 = vst.msk [vmem:[%s294 + $0xf8] sm:$0xff] %vm529, %v1667
          %1796 = vst.msk [vmem:[%s299] sm:$0xff] %vm529, %v1732
          %1797 = vst.msk [vmem:[%s299 + $0x8] sm:$0xff] %vm529, %v1733
          %1798 = vst.msk [vmem:[%s299 + $0x10] sm:$0xff] %vm529, %v1734
          %1799 = vst.msk [vmem:[%s299 + $0x18] sm:$0xff] %vm529, %v1735
          %1800 = vst.msk [vmem:[%s299 + $0x20] sm:$0xff] %vm529, %v1736
          %1801 = vst.msk [vmem:[%s299 + $0x28] sm:$0xff] %vm529, %v1737
          %1802 = vst.msk [vmem:[%s299 + $0x30] sm:$0xff] %vm529, %v1738
          %1803 = vst.msk [vmem:[%s299 + $0x38] sm:$0xff] %vm529, %v1739
          %1804 = vst.msk [vmem:[%s299 + $0x40] sm:$0xff] %vm529, %v1740
          %1805 = vst.msk [vmem:[%s299 + $0x48] sm:$0xff] %vm529, %v1741
          %1806 = vst.msk [vmem:[%s299 + $0x50] sm:$0xff] %vm529, %v1742
          %1807 = vst.msk [vmem:[%s299 + $0x58] sm:$0xff] %vm529, %v1743
          %1808 = vst.msk [vmem:[%s299 + $0x60] sm:$0xff] %vm529, %v1744
          %1809 = vst.msk [vmem:[%s299 + $0x68] sm:$0xff] %vm529, %v1745
          %1810 = vst.msk [vmem:[%s299 + $0x70] sm:$0xff] %vm529, %v1746
          %1811 = vst.msk [vmem:[%s299 + $0x78] sm:$0xff] %vm529, %v1747
          %1812 = vst.msk [vmem:[%s299 + $0x80] sm:$0xff] %vm529, %v1748
          %1813 = vst.msk [vmem:[%s299 + $0x88] sm:$0xff] %vm529, %v1749
          %1814 = vst.msk [vmem:[%s299 + $0x90] sm:$0xff] %vm529, %v1750
          %1815 = vst.msk [vmem:[%s299 + $0x98] sm:$0xff] %vm529, %v1751
          %1816 = vst.msk [vmem:[%s299 + $0xa0] sm:$0xff] %vm529, %v1752
          %1817 = vst.msk [vmem:[%s299 + $0xa8] sm:$0xff] %vm529, %v1753
          %1818 = vst.msk [vmem:[%s299 + $0xb0] sm:$0xff] %vm529, %v1754
          %1819 = vst.msk [vmem:[%s299 + $0xb8] sm:$0xff] %vm529, %v1755
          %1820 = vst.msk [vmem:[%s299 + $0xc0] sm:$0xff] %vm529, %v1756
          %1821 = vst.msk [vmem:[%s299 + $0xc8] sm:$0xff] %vm529, %v1757
          %1822 = vst.msk [vmem:[%s299 + $0xd0] sm:$0xff] %vm529, %v1758
          %1823 = vst.msk [vmem:[%s299 + $0xd8] sm:$0xff] %vm529, %v1759
          %1824 = vst.msk [vmem:[%s299 + $0xe0] sm:$0xff] %vm529, %v1760
          %1825 = vst.msk [vmem:[%s299 + $0xe8] sm:$0xff] %vm529, %v1761
          %1826 = vst.msk [vmem:[%s299 + $0xf0] sm:$0xff] %vm529, %v1762
          %1827 = vst.msk [vmem:[%s299 + $0xf8] sm:$0xff] %vm529, %v1763
        $region52: #{tpu_custom_call.1} parent=39 // pred_fallthru
          _
        %p1828 = scmp.lt.s32.totalorder %s25, 1
        %s1829 = scalar_select %p1828, %s25, 1
        %s1830 = smul.addr %s1829, 32
        %s1831 = smul.addr %s1830, 8
        %s1832 = scalar_lea.vmem %s5, %s1831
        %p1833 = scmp.lt.s32.totalorder %s25, 1
        %s1834 = scalar_select %p1833, %s25, 1
        %s1835 = smul.addr %s1834, 32
        %s1836 = smul.addr %s1835, 8
        %s1837 = scalar_lea.vmem %s6, %s1836
        // Predicated region
        $region53: #{tpu_custom_call.1} parent=39 // pred_check
          %p1838 = pneg %p163
        $region54: #{tpu_custom_call.1} parent=39 // pred_check_branch
          %1840 = sbr.rel (%p1838) target = $region56
        $region55: #{tpu_custom_call.1} parent=39 // pred_region
          _
        $region56: #{tpu_custom_call.1} parent=39 // pred_fallthru
          _
        // Predicated region
        $region57: #{tpu_custom_call.1} parent=39 // pred_check
          %p1841 = pneg %p189
        $region58: #{tpu_custom_call.1} parent=39 // pred_check_branch
          %1843 = sbr.rel (%p1841) target = $region60
        $region59: #{tpu_custom_call.1} parent=39 // pred_region
          _
        $region60: #{tpu_custom_call.1} parent=39 // pred_fallthru
          _
      $region40: #{tpu_custom_call.1} parent=5 // pred_fallthru
        _
      %p1844 = scmp.le.s32.totalorder 2, %s16
      // Predicated region
      $region61: #{tpu_custom_call.1} parent=5 // pred_check
        %p1845 = pneg %p1844
      $region62: #{tpu_custom_call.1} parent=5 // pred_check_branch
        %1847 = sbr.rel (%p1845) target = $region64
      $region63: #{tpu_custom_call.1} parent=5 // pred_region
        %s1848 = ssub.s32 %s16, 2
        // Predicated region
        $region65: #{tpu_custom_call.1} parent=63 // pred_check
          %p1849 = pneg %p169
        $region66: #{tpu_custom_call.1} parent=63 // pred_check_branch
          %1851 = sbr.rel (%p1849) target = $region68
        $region67: #{tpu_custom_call.1} parent=63 // pred_region
          %p1852 = scmp.lt.s32.totalorder %s27, 1
          %s1853 = scalar_select %p1852, %s27, 1
          %s1854 = smul.addr %s1853, 32
          %s1855 = smul.addr %s1854, 8
          %s1856 = scalar_lea.vmem %s5, %s1855
        $region68: #{tpu_custom_call.1} parent=63 // pred_fallthru
          _
        // Predicated region
        $region69: #{tpu_custom_call.1} parent=63 // pred_check
          %p1857 = pneg %p195
        $region70: #{tpu_custom_call.1} parent=63 // pred_check_branch
          %1859 = sbr.rel (%p1857) target = $region72
        $region71: #{tpu_custom_call.1} parent=63 // pred_region
          %p1860 = scmp.lt.s32.totalorder %s27, 1
          %s1861 = scalar_select %p1860, %s27, 1
          %s1862 = smul.addr %s1861, 32
          %s1863 = smul.addr %s1862, 8
          %s1864 = scalar_lea.vmem %s6, %s1863
        $region72: #{tpu_custom_call.1} parent=63 // pred_fallthru
          _
      $region64: #{tpu_custom_call.1} parent=5 // pred_fallthru
        _
    $region6: #{tpu_custom_call.1} parent=1 // loop_footer
      %s20 = sadd.s32 1, %s16
    $region7: #{tpu_custom_call.1} parent=1 // loop_footer_branch
      %15 = sbr.rel target = $region3
    $region8: #{tpu_custom_call.1} parent=1 // loop_exit
      _
    %1865 = vsyncpa [#allocation5], 1
    %s1866 = scalar_lea.sflag [#allocation5], 1
    %1867 = vsyncpa %s1866, 1

</llo_original>
